<compile_context>
chip_gen: v6e
topology: v6e:2x2x1
jax: 0.10.0
libtpu: 0.0.40
codegen_flags: <defaults>
</compile_context>

<pallas_src>
import functools

import jax
import jax.numpy as jnp
from jax.experimental import pallas as pl
from jax.experimental.pallas import tpu as pltpu

EPS = 1e-5  # nn.BatchNorm1d default


def _evolver_kernel(field_ref, w1_ref, w2_ref, w3r_ref,
                    g1_ref, be1_ref, g2_ref, be2_ref, bias_ref,
                    out_ref, *, num_points, time_steps, matmul_dtype):
    N, D = field_ref.shape          # N = B * M
    M = num_points

    # ---- hoisted parameter loads (weights already pre-cast to matmul_dtype) ------
    w1 = w1_ref[...]                # [3*D, H]       conv1 taps fused along K
    w2 = w2_ref[...]                # [3*H, H]       conv2 taps fused along K
    w3r = w3r_ref[...]              # [3*H + D, D]   conv3 taps ++ residual Linear
    g1 = g1_ref[...]
    be1 = be1_ref[...]
    g2 = g2_ref[...]
    be2 = be2_ref[...]
    bias = bias_ref[...]            # [1, D]  = conv3 bias + residual bias (folded)

    # ---- hoisted Conv1d(k=3, pad=1) boundary masks on the flattened row axis -----
    row = jax.lax.broadcasted_iota(jnp.int32, (N, 1), 0)
    m_pos = jax.lax.rem(row, M)
    prev_mask = (m_pos != 0).astype(jnp.float32)       # zero the m-1 tap at m == 0
    next_mask = (m_pos != M - 1).astype(jnp.float32)   # zero the m+1 tap at m == M-1

    # ---- hoisted ones-row for MXU-based BatchNorm reductions ---------------------
    ones_row = jnp.ones((1, N), jnp.float32)
    inv_n = jnp.float32(1.0 / N)

    def shift3(x):
        # x: [N, C] f32 -> [N, 3C] matmul_dtype, tap order [x_{m-1} | x_m | x_{m+1}].
        # Rolls (XLU) + masks stay f32 (packed-bf16 sublane rotates can hit Mosaic
        # relayout limits); casting right before the concat still halves the [N, 3C]
        # materialization and feeds the MXU bf16 operands.
        xp = pltpu.roll(x, shift=1, axis=0) * prev_mask
        xn = pltpu.roll(x, shift=N - 1, axis=0) * next_mask
        return jnp.concatenate([xp.astype(matmul_dtype),
                                x.astype(matmul_dtype),
                                xn.astype(matmul_dtype)], axis=-1)

    def batchnorm(x, g, be):
        # Training-mode BN: per-channel stats over all N = B*M rows, biased variance.
        # The sum / sum-of-squares reduction is one ones-row MXU matmul (f32) instead
        # of two cross-sublane XLU reductions.
        C = x.shape[-1]
        sums = jnp.dot(ones_row, jnp.concatenate([x, x * x], axis=-1),
                       preferred_element_type=jnp.float32) * inv_n   # [1, 2C]
        mean = sums[:, :C]
        msq = sums[:, C:]
        var = jnp.maximum(msq - mean * mean, 0.0)   # one-pass; clamped vs cancellation
        inv = jax.lax.rsqrt(var + EPS)
        return (x - mean) * (inv * g) + be

    def step(field):
        # Conv1/Conv2 biases intentionally omitted: training-mode BN subtracts the
        # batch mean right after the conv, cancelling any per-channel constant.
        h = jnp.dot(shift3(field), w1, preferred_element_type=jnp.float32)
        h = jnp.maximum(batchnorm(h, g1, be1), 0.0)
        h = jnp.dot(shift3(h), w2, preferred_element_type=jnp.float32)
        h = jnp.maximum(batchnorm(h, g2, be2), 0.0)
        # Fused conv3 + residual Linear: one MXU push with K = 3H + D.
        x3 = jnp.concatenate([shift3(h), field.astype(matmul_dtype)], axis=-1)
        upd = jnp.dot(x3, w3r, preferred_element_type=jnp.float32)
        return field + upd + bias

    field = field_ref[...].astype(jnp.float32)
    field = jax.lax.fori_loop(0, time_steps, lambda _, f: step(f), field,
                              unroll=time_steps <= 4)
    out_ref[...] = field.astype(out_ref.dtype)


def cnn_field_evolver(field, grid_points, params, time_steps=1,
                      matmul_dtype=jnp.bfloat16):
    """field: [B, M, D] f32; grid_points: [B, M, P] (unused, mirrors reference API).

    matmul_dtype=jnp.bfloat16 (default) feeds the MXU bf16 operands with f32
    accumulation; pass jnp.float32 for bit-faithful matmuls."""
    del grid_points  # not used by the CNN evolver (matches the PyTorch module)
    B, M, D = field.shape
    H = params["w1"].shape[2]
    N = B * M

    # Free XLA-side layout plumbing: 2-D slab in, 2-D slab out.
    field2d = field.reshape(N, D)

    # Pre-fused weights (one-time, outside the kernel):
    #   conv taps concatenated along K; conv3 additionally fused with the residual
    #   Linear; all pre-cast to the MXU operand dtype.
    w1 = params["w1"].reshape(3 * D, H).astype(matmul_dtype)
    w2 = params["w2"].reshape(3 * H, H).astype(matmul_dtype)
    w3r = jnp.concatenate([params["w3"].reshape(3 * H, D), params["wr"]],
                          axis=0).astype(matmul_dtype)            # [3H + D, D]
    bias = (params["b3"] + params["br"]).astype(jnp.float32)      # folded per-step bias
    # b1 / b2 are NOT passed: training-mode BN cancels them exactly.

    args = (field2d, w1, w2, w3r,
            params["g1"], params["be1"], params["g2"], params["be2"], bias)

    vmem = pl.BlockSpec(memory_space=pltpu.MemorySpace.VMEM)

    flops = 2 * N * (3 * D * H + 3 * H * H + (3 * H + D) * D + 4 * H) * time_steps
    bytes_accessed = 4 * 2 * N * D + sum(int(a.size) * a.dtype.itemsize
                                         for a in args[1:])
    cost = pl.CostEstimate(flops=int(flops), transcendentals=int(2 * H * time_steps),
                           bytes_accessed=int(bytes_accessed))

    # Scoped-VMEM budget from the actual working set (v5e scoped default is 16 MiB).
    eb = jnp.dtype(matmul_dtype).itemsize
    work = (4 * (2 * N * D + 4 * H + 2 * D)                       # field/out + BN params
            + eb * (w1.size + w2.size + w3r.size)                 # fused weights
            + N * (eb * (6 * H + 3 * D + D) + 4 * 4 * H))         # per-step live slabs
    vmem_limit = int(min(64 * 2 ** 20, max(32 * 2 ** 20, 2 * int(work))))

    out2d = pl.pallas_call(
        functools.partial(_evolver_kernel, num_points=M, time_steps=time_steps,
                          matmul_dtype=matmul_dtype),
        out_shape=jax.ShapeDtypeStruct((N, D), jnp.float32),
        in_specs=[vmem] * len(args),
        out_specs=vmem,
        compiler_params=pltpu.CompilerParams(vmem_limit_bytes=vmem_limit),
        cost_estimate=cost,
    )(*args)
    return out2d.reshape(B, M, D)


# ---- PyTorch weight import helpers (layout documented explicitly) ----------------
def conv_weight_from_pytorch(w_out_in_k):
    """nn.Conv1d weight [Cout, Cin, k=3] -> kernel layout [k, Cin, Cout]
    (tap 0 multiplies x[m-1])."""
    return jnp.transpose(jnp.asarray(w_out_in_k), (2, 1, 0))


def linear_weight_from_pytorch(w_out_in):
    """nn.Linear weight [Dout, Din] -> kernel layout [Din, Dout]."""
    return jnp.transpose(jnp.asarray(w_out_in), (1, 0))


def init_params(key, embed_dim, hidden_dim):
    """Deterministic synthetic parameters.

    Conv weights stored as [3, Cin, Cout] (use conv_weight_from_pytorch to import
    real [Cout, Cin, 3] weights); residual Linear stored as [Din, Dout].
    b1/b2 are kept for API parity but are mathematically cancelled by the
    training-mode BatchNorm mean subtraction, so the kernel does not consume them."""
    ks = jax.random.split(key, 8)
    s = 0.1
    return {
        "w1": s * jax.random.normal(ks[0], (3, embed_dim, hidden_dim), jnp.float32),
        "b1": s * jax.random.normal(ks[1], (1, hidden_dim), jnp.float32),
        "w2": s * jax.random.normal(ks[2], (3, hidden_dim, hidden_dim), jnp.float32),
        "b2": s * jax.random.normal(ks[3], (1, hidden_dim), jnp.float32),
        "w3": s * jax.random.normal(ks[4], (3, hidden_dim, embed_dim), jnp.float32),
        "b3": s * jax.random.normal(ks[5], (1, embed_dim), jnp.float32),
        "g1": jnp.ones((1, hidden_dim), jnp.float32),    # BatchNorm affine init
        "be1": jnp.zeros((1, hidden_dim), jnp.float32),
        "g2": jnp.ones((1, hidden_dim), jnp.float32),
        "be2": jnp.zeros((1, hidden_dim), jnp.float32),
        "wr": s * jax.random.normal(ks[6], (embed_dim, embed_dim), jnp.float32),
        "br": s * jax.random.normal(ks[7], (1, embed_dim), jnp.float32),
    }


if __name__ == "__main__":
    B, M, D, P = 2, 16, 32, 3     # batch, num_points, embed_dim, pos_dim
    H = 128                       # hidden_dim (module default; MXU-friendlier width)
    TIME_STEPS = 2

    key = jax.random.PRNGKey(0)
    k_field, k_grid, k_param = jax.random.split(key, 3)

    field = jax.random.normal(k_field, (B, M, D), jnp.float32)
    grid_points = jax.random.normal(k_grid, (B, M, P), jnp.float32)  # unused by CNN path
    params = init_params(k_param, D, H)

    out = cnn_field_evolver(field, grid_points, params, time_steps=TIME_STEPS)
    out = jax.block_until_ready(out)
    assert out.shape == (B, M, D) and out.dtype == jnp.float32
    assert bool(jnp.all(jnp.isfinite(out)))
    print("KERNEL_OK")
</pallas_src>

<mosaic_0001>
module attributes {stable_mosaic.version = 11 : i64} {
  func.func @_evolver_kernel(%arg0: memref<32x32xf32, #tpu.memory_space<vmem>>, %arg1: memref<96x128xbf16, #tpu.memory_space<vmem>>, %arg2: memref<384x128xbf16, #tpu.memory_space<vmem>>, %arg3: memref<416x32xbf16, #tpu.memory_space<vmem>>, %arg4: memref<1x128xf32, #tpu.memory_space<vmem>>, %arg5: memref<1x128xf32, #tpu.memory_space<vmem>>, %arg6: memref<1x128xf32, #tpu.memory_space<vmem>>, %arg7: memref<1x128xf32, #tpu.memory_space<vmem>>, %arg8: memref<1x32xf32, #tpu.memory_space<vmem>>, %arg9: memref<32x32xf32, #tpu.memory_space<vmem>>) attributes {dimension_semantics = [], scalar_prefetch = 0 : i64, scratch_operands = 0 : i64, tpu.core_type = #tpu.core_type<tc>} {
    %c0 = arith.constant 0 : index
    %c0_0 = arith.constant 0 : index
    %0 = vector.load %arg1[%c0, %c0_0] : memref<96x128xbf16, #tpu.memory_space<vmem>>, vector<96x128xbf16>
    %c0_1 = arith.constant 0 : index
    %c0_2 = arith.constant 0 : index
    %1 = vector.load %arg2[%c0_1, %c0_2] : memref<384x128xbf16, #tpu.memory_space<vmem>>, vector<384x128xbf16>
    %c0_3 = arith.constant 0 : index
    %c0_4 = arith.constant 0 : index
    %2 = vector.load %arg3[%c0_3, %c0_4] : memref<416x32xbf16, #tpu.memory_space<vmem>>, vector<416x32xbf16>
    %c0_5 = arith.constant 0 : index
    %c0_6 = arith.constant 0 : index
    %3 = vector.load %arg4[%c0_5, %c0_6] : memref<1x128xf32, #tpu.memory_space<vmem>>, vector<1x128xf32>
    %c0_7 = arith.constant 0 : index
    %c0_8 = arith.constant 0 : index
    %4 = vector.load %arg5[%c0_7, %c0_8] : memref<1x128xf32, #tpu.memory_space<vmem>>, vector<1x128xf32>
    %c0_9 = arith.constant 0 : index
    %c0_10 = arith.constant 0 : index
    %5 = vector.load %arg6[%c0_9, %c0_10] : memref<1x128xf32, #tpu.memory_space<vmem>>, vector<1x128xf32>
    %c0_11 = arith.constant 0 : index
    %c0_12 = arith.constant 0 : index
    %6 = vector.load %arg7[%c0_11, %c0_12] : memref<1x128xf32, #tpu.memory_space<vmem>>, vector<1x128xf32>
    %c0_13 = arith.constant 0 : index
    %c0_14 = arith.constant 0 : index
    %7 = vector.load %arg8[%c0_13, %c0_14] : memref<1x32xf32, #tpu.memory_space<vmem>>, vector<1x32xf32>
    %8 = tpu.iota {dimensions = array<i32: 0>} : vector<32x1xi32>
    %c16_i32 = arith.constant 16 : i32
    %9 = vector.broadcast %c16_i32 : i32 to vector<32x1xi32>
    %10 = arith.remsi %8, %9 : vector<32x1xi32>
    %c0_i32 = arith.constant 0 : i32
    %11 = vector.broadcast %c0_i32 : i32 to vector<32x1xi32>
    %12 = arith.cmpi ne, %10, %11 : vector<32x1xi32>
    %13 = arith.extui %12 : vector<32x1xi1> to vector<32x1xi32>
    %14 = arith.sitofp %13 : vector<32x1xi32> to vector<32x1xf32>
    %c15_i32 = arith.constant 15 : i32
    %15 = vector.broadcast %c15_i32 : i32 to vector<32x1xi32>
    %16 = arith.cmpi ne, %10, %15 : vector<32x1xi32>
    %17 = arith.extui %16 : vector<32x1xi1> to vector<32x1xi32>
    %18 = arith.sitofp %17 : vector<32x1xi32> to vector<32x1xf32>
    %cst = arith.constant 1.000000e+00 : f32
    %19 = vector.broadcast %cst : f32 to vector<1x32xf32>
    %c0_15 = arith.constant 0 : index
    %c0_16 = arith.constant 0 : index
    %20 = vector.load %arg0[%c0_15, %c0_16] : memref<32x32xf32, #tpu.memory_space<vmem>>, vector<32x32xf32>
    %cst_17 = arith.constant 3.125000e-02 : f32
    %c0_i32_18 = arith.constant 0 : i32
    %c1_i32 = arith.constant 1 : i32
    %21 = tpu.dynamic_rotate %20 by %c1_i32 dim 0 : vector<32x32xf32>, i32 -> vector<32x32xf32>
    %22 = vector.broadcast %14 : vector<32x1xf32> to vector<32x32xf32>
    %23 = arith.mulf %21, %22 : vector<32x32xf32>
    %c31_i32 = arith.constant 31 : i32
    %24 = tpu.dynamic_rotate %20 by %c31_i32 dim 0 : vector<32x32xf32>, i32 -> vector<32x32xf32>
    %25 = vector.broadcast %18 : vector<32x1xf32> to vector<32x32xf32>
    %26 = arith.mulf %24, %25 : vector<32x32xf32>
    %27 = arith.truncf %23 : vector<32x32xf32> to vector<32x32xbf16>
    %28 = arith.truncf %20 : vector<32x32xf32> to vector<32x32xbf16>
    %29 = arith.truncf %26 : vector<32x32xf32> to vector<32x32xbf16>
    %30 = tpu.concatenate %27, %28, %29 in 1 : vector<32x32xbf16>, vector<32x32xbf16>, vector<32x32xbf16> -> vector<32x96xbf16>
    %cst_19 = arith.constant dense<0.000000e+00> : vector<32x128xf32>
    %31 = tpu.matmul %30, %0, %cst_19 {dimension_numbers = #tpu.dot_dimension_numbers<[1], [0], [0], [1], [0, 0, 1, 1], [], []>} : vector<32x96xbf16>, vector<96x128xbf16>, vector<32x128xf32> -> vector<32x128xf32>
    %32 = arith.mulf %31, %31 : vector<32x128xf32>
    %33 = tpu.concatenate %31, %32 in 1 : vector<32x128xf32>, vector<32x128xf32> -> vector<32x256xf32>
    %cst_20 = arith.constant dense<0.000000e+00> : vector<1x256xf32>
    %34 = tpu.matmul %19, %33, %cst_20 {dimension_numbers = #tpu.dot_dimension_numbers<[1], [0], [0], [1], [0, 0, 1, 1], [], []>} : vector<1x32xf32>, vector<32x256xf32>, vector<1x256xf32> -> vector<1x256xf32>
    %35 = vector.broadcast %cst_17 : f32 to vector<1x256xf32>
    %36 = arith.mulf %34, %35 : vector<1x256xf32>
    %37 = vector.extract_strided_slice %36 {offsets = [0, 0], sizes = [1, 128], strides = [1, 1]} : vector<1x256xf32> to vector<1x128xf32>
    %38 = vector.extract_strided_slice %36 {offsets = [0, 128], sizes = [1, 128], strides = [1, 1]} : vector<1x256xf32> to vector<1x128xf32>
    %39 = arith.mulf %37, %37 : vector<1x128xf32>
    %40 = arith.subf %38, %39 : vector<1x128xf32>
    %cst_21 = arith.constant 0.000000e+00 : f32
    %41 = vector.broadcast %cst_21 : f32 to vector<1x128xf32>
    %42 = arith.maximumf %40, %41 : vector<1x128xf32>
    %cst_22 = arith.constant 9.99999974E-6 : f32
    %43 = vector.broadcast %cst_22 : f32 to vector<1x128xf32>
    %44 = arith.addf %42, %43 : vector<1x128xf32>
    %45 = math.rsqrt %44 : vector<1x128xf32>
    %46 = vector.broadcast %37 : vector<1x128xf32> to vector<32x128xf32>
    %47 = arith.subf %31, %46 : vector<32x128xf32>
    %48 = arith.mulf %45, %3 : vector<1x128xf32>
    %49 = vector.broadcast %48 : vector<1x128xf32> to vector<32x128xf32>
    %50 = arith.mulf %47, %49 : vector<32x128xf32>
    %51 = vector.broadcast %4 : vector<1x128xf32> to vector<32x128xf32>
    %52 = arith.addf %50, %51 : vector<32x128xf32>
    %cst_23 = arith.constant 0.000000e+00 : f32
    %53 = vector.broadcast %cst_23 : f32 to vector<32x128xf32>
    %54 = arith.maximumf %52, %53 : vector<32x128xf32>
    %c1_i32_24 = arith.constant 1 : i32
    %55 = tpu.dynamic_rotate %54 by %c1_i32_24 dim 0 : vector<32x128xf32>, i32 -> vector<32x128xf32>
    %56 = vector.broadcast %14 : vector<32x1xf32> to vector<32x128xf32>
    %57 = arith.mulf %55, %56 : vector<32x128xf32>
    %c31_i32_25 = arith.constant 31 : i32
    %58 = tpu.dynamic_rotate %54 by %c31_i32_25 dim 0 : vector<32x128xf32>, i32 -> vector<32x128xf32>
    %59 = vector.broadcast %18 : vector<32x1xf32> to vector<32x128xf32>
    %60 = arith.mulf %58, %59 : vector<32x128xf32>
    %61 = arith.truncf %57 : vector<32x128xf32> to vector<32x128xbf16>
    %62 = arith.truncf %54 : vector<32x128xf32> to vector<32x128xbf16>
    %63 = arith.truncf %60 : vector<32x128xf32> to vector<32x128xbf16>
    %64 = tpu.concatenate %61, %62, %63 in 1 : vector<32x128xbf16>, vector<32x128xbf16>, vector<32x128xbf16> -> vector<32x384xbf16>
    %cst_26 = arith.constant dense<0.000000e+00> : vector<32x128xf32>
    %65 = tpu.matmul %64, %1, %cst_26 {dimension_numbers = #tpu.dot_dimension_numbers<[1], [0], [0], [1], [0, 0, 1, 1], [], []>} : vector<32x384xbf16>, vector<384x128xbf16>, vector<32x128xf32> -> vector<32x128xf32>
    %66 = arith.mulf %65, %65 : vector<32x128xf32>
    %67 = tpu.concatenate %65, %66 in 1 : vector<32x128xf32>, vector<32x128xf32> -> vector<32x256xf32>
    %cst_27 = arith.constant dense<0.000000e+00> : vector<1x256xf32>
    %68 = tpu.matmul %19, %67, %cst_27 {dimension_numbers = #tpu.dot_dimension_numbers<[1], [0], [0], [1], [0, 0, 1, 1], [], []>} : vector<1x32xf32>, vector<32x256xf32>, vector<1x256xf32> -> vector<1x256xf32>
    %69 = vector.broadcast %cst_17 : f32 to vector<1x256xf32>
    %70 = arith.mulf %68, %69 : vector<1x256xf32>
    %71 = vector.extract_strided_slice %70 {offsets = [0, 0], sizes = [1, 128], strides = [1, 1]} : vector<1x256xf32> to vector<1x128xf32>
    %72 = vector.extract_strided_slice %70 {offsets = [0, 128], sizes = [1, 128], strides = [1, 1]} : vector<1x256xf32> to vector<1x128xf32>
    %73 = arith.mulf %71, %71 : vector<1x128xf32>
    %74 = arith.subf %72, %73 : vector<1x128xf32>
    %cst_28 = arith.constant 0.000000e+00 : f32
    %75 = vector.broadcast %cst_28 : f32 to vector<1x128xf32>
    %76 = arith.maximumf %74, %75 : vector<1x128xf32>
    %cst_29 = arith.constant 9.99999974E-6 : f32
    %77 = vector.broadcast %cst_29 : f32 to vector<1x128xf32>
    %78 = arith.addf %76, %77 : vector<1x128xf32>
    %79 = math.rsqrt %78 : vector<1x128xf32>
    %80 = vector.broadcast %71 : vector<1x128xf32> to vector<32x128xf32>
    %81 = arith.subf %65, %80 : vector<32x128xf32>
    %82 = arith.mulf %79, %5 : vector<1x128xf32>
    %83 = vector.broadcast %82 : vector<1x128xf32> to vector<32x128xf32>
    %84 = arith.mulf %81, %83 : vector<32x128xf32>
    %85 = vector.broadcast %6 : vector<1x128xf32> to vector<32x128xf32>
    %86 = arith.addf %84, %85 : vector<32x128xf32>
    %cst_30 = arith.constant 0.000000e+00 : f32
    %87 = vector.broadcast %cst_30 : f32 to vector<32x128xf32>
    %88 = arith.maximumf %86, %87 : vector<32x128xf32>
    %c1_i32_31 = arith.constant 1 : i32
    %89 = tpu.dynamic_rotate %88 by %c1_i32_31 dim 0 : vector<32x128xf32>, i32 -> vector<32x128xf32>
    %90 = vector.broadcast %14 : vector<32x1xf32> to vector<32x128xf32>
    %91 = arith.mulf %89, %90 : vector<32x128xf32>
    %c31_i32_32 = arith.constant 31 : i32
    %92 = tpu.dynamic_rotate %88 by %c31_i32_32 dim 0 : vector<32x128xf32>, i32 -> vector<32x128xf32>
    %93 = vector.broadcast %18 : vector<32x1xf32> to vector<32x128xf32>
    %94 = arith.mulf %92, %93 : vector<32x128xf32>
    %95 = arith.truncf %91 : vector<32x128xf32> to vector<32x128xbf16>
    %96 = arith.truncf %88 : vector<32x128xf32> to vector<32x128xbf16>
    %97 = arith.truncf %94 : vector<32x128xf32> to vector<32x128xbf16>
    %98 = tpu.concatenate %95, %96, %97 in 1 : vector<32x128xbf16>, vector<32x128xbf16>, vector<32x128xbf16> -> vector<32x384xbf16>
    %99 = arith.truncf %20 : vector<32x32xf32> to vector<32x32xbf16>
    %100 = tpu.concatenate %98, %99 in 1 : vector<32x384xbf16>, vector<32x32xbf16> -> vector<32x416xbf16>
    %cst_33 = arith.constant dense<0.000000e+00> : vector<32x32xf32>
    %101 = tpu.matmul %100, %2, %cst_33 {dimension_numbers = #tpu.dot_dimension_numbers<[1], [0], [0], [1], [0, 0, 1, 1], [], []>} : vector<32x416xbf16>, vector<416x32xbf16>, vector<32x32xf32> -> vector<32x32xf32>
    %102 = arith.addf %20, %101 : vector<32x32xf32>
    %103 = vector.broadcast %7 : vector<1x32xf32> to vector<32x32xf32>
    %104 = arith.addf %102, %103 : vector<32x32xf32>
    %c1_i32_34 = arith.constant 1 : i32
    %c1_i32_35 = arith.constant 1 : i32
    %105 = tpu.dynamic_rotate %104 by %c1_i32_35 dim 0 : vector<32x32xf32>, i32 -> vector<32x32xf32>
    %106 = vector.broadcast %14 : vector<32x1xf32> to vector<32x32xf32>
    %107 = arith.mulf %105, %106 : vector<32x32xf32>
    %c31_i32_36 = arith.constant 31 : i32
    %108 = tpu.dynamic_rotate %104 by %c31_i32_36 dim 0 : vector<32x32xf32>, i32 -> vector<32x32xf32>
    %109 = vector.broadcast %18 : vector<32x1xf32> to vector<32x32xf32>
    %110 = arith.mulf %108, %109 : vector<32x32xf32>
    %111 = arith.truncf %107 : vector<32x32xf32> to vector<32x32xbf16>
    %112 = arith.truncf %104 : vector<32x32xf32> to vector<32x32xbf16>
    %113 = arith.truncf %110 : vector<32x32xf32> to vector<32x32xbf16>
    %114 = tpu.concatenate %111, %112, %113 in 1 : vector<32x32xbf16>, vector<32x32xbf16>, vector<32x32xbf16> -> vector<32x96xbf16>
    %cst_37 = arith.constant dense<0.000000e+00> : vector<32x128xf32>
    %115 = tpu.matmul %114, %0, %cst_37 {dimension_numbers = #tpu.dot_dimension_numbers<[1], [0], [0], [1], [0, 0, 1, 1], [], []>} : vector<32x96xbf16>, vector<96x128xbf16>, vector<32x128xf32> -> vector<32x128xf32>
    %116 = arith.mulf %115, %115 : vector<32x128xf32>
    %117 = tpu.concatenate %115, %116 in 1 : vector<32x128xf32>, vector<32x128xf32> -> vector<32x256xf32>
    %cst_38 = arith.constant dense<0.000000e+00> : vector<1x256xf32>
    %118 = tpu.matmul %19, %117, %cst_38 {dimension_numbers = #tpu.dot_dimension_numbers<[1], [0], [0], [1], [0, 0, 1, 1], [], []>} : vector<1x32xf32>, vector<32x256xf32>, vector<1x256xf32> -> vector<1x256xf32>
    %119 = vector.broadcast %cst_17 : f32 to vector<1x256xf32>
    %120 = arith.mulf %118, %119 : vector<1x256xf32>
    %121 = vector.extract_strided_slice %120 {offsets = [0, 0], sizes = [1, 128], strides = [1, 1]} : vector<1x256xf32> to vector<1x128xf32>
    %122 = vector.extract_strided_slice %120 {offsets = [0, 128], sizes = [1, 128], strides = [1, 1]} : vector<1x256xf32> to vector<1x128xf32>
    %123 = arith.mulf %121, %121 : vector<1x128xf32>
    %124 = arith.subf %122, %123 : vector<1x128xf32>
    %cst_39 = arith.constant 0.000000e+00 : f32
    %125 = vector.broadcast %cst_39 : f32 to vector<1x128xf32>
    %126 = arith.maximumf %124, %125 : vector<1x128xf32>
    %cst_40 = arith.constant 9.99999974E-6 : f32
    %127 = vector.broadcast %cst_40 : f32 to vector<1x128xf32>
    %128 = arith.addf %126, %127 : vector<1x128xf32>
    %129 = math.rsqrt %128 : vector<1x128xf32>
    %130 = vector.broadcast %121 : vector<1x128xf32> to vector<32x128xf32>
    %131 = arith.subf %115, %130 : vector<32x128xf32>
    %132 = arith.mulf %129, %3 : vector<1x128xf32>
    %133 = vector.broadcast %132 : vector<1x128xf32> to vector<32x128xf32>
    %134 = arith.mulf %131, %133 : vector<32x128xf32>
    %135 = vector.broadcast %4 : vector<1x128xf32> to vector<32x128xf32>
    %136 = arith.addf %134, %135 : vector<32x128xf32>
    %cst_41 = arith.constant 0.000000e+00 : f32
    %137 = vector.broadcast %cst_41 : f32 to vector<32x128xf32>
    %138 = arith.maximumf %136, %137 : vector<32x128xf32>
    %c1_i32_42 = arith.constant 1 : i32
    %139 = tpu.dynamic_rotate %138 by %c1_i32_42 dim 0 : vector<32x128xf32>, i32 -> vector<32x128xf32>
    %140 = vector.broadcast %14 : vector<32x1xf32> to vector<32x128xf32>
    %141 = arith.mulf %139, %140 : vector<32x128xf32>
    %c31_i32_43 = arith.constant 31 : i32
    %142 = tpu.dynamic_rotate %138 by %c31_i32_43 dim 0 : vector<32x128xf32>, i32 -> vector<32x128xf32>
    %143 = vector.broadcast %18 : vector<32x1xf32> to vector<32x128xf32>
    %144 = arith.mulf %142, %143 : vector<32x128xf32>
    %145 = arith.truncf %141 : vector<32x128xf32> to vector<32x128xbf16>
    %146 = arith.truncf %138 : vector<32x128xf32> to vector<32x128xbf16>
    %147 = arith.truncf %144 : vector<32x128xf32> to vector<32x128xbf16>
    %148 = tpu.concatenate %145, %146, %147 in 1 : vector<32x128xbf16>, vector<32x128xbf16>, vector<32x128xbf16> -> vector<32x384xbf16>
    %cst_44 = arith.constant dense<0.000000e+00> : vector<32x128xf32>
    %149 = tpu.matmul %148, %1, %cst_44 {dimension_numbers = #tpu.dot_dimension_numbers<[1], [0], [0], [1], [0, 0, 1, 1], [], []>} : vector<32x384xbf16>, vector<384x128xbf16>, vector<32x128xf32> -> vector<32x128xf32>
    %150 = arith.mulf %149, %149 : vector<32x128xf32>
    %151 = tpu.concatenate %149, %150 in 1 : vector<32x128xf32>, vector<32x128xf32> -> vector<32x256xf32>
    %cst_45 = arith.constant dense<0.000000e+00> : vector<1x256xf32>
    %152 = tpu.matmul %19, %151, %cst_45 {dimension_numbers = #tpu.dot_dimension_numbers<[1], [0], [0], [1], [0, 0, 1, 1], [], []>} : vector<1x32xf32>, vector<32x256xf32>, vector<1x256xf32> -> vector<1x256xf32>
    %153 = vector.broadcast %cst_17 : f32 to vector<1x256xf32>
    %154 = arith.mulf %152, %153 : vector<1x256xf32>
    %155 = vector.extract_strided_slice %154 {offsets = [0, 0], sizes = [1, 128], strides = [1, 1]} : vector<1x256xf32> to vector<1x128xf32>
    %156 = vector.extract_strided_slice %154 {offsets = [0, 128], sizes = [1, 128], strides = [1, 1]} : vector<1x256xf32> to vector<1x128xf32>
    %157 = arith.mulf %155, %155 : vector<1x128xf32>
    %158 = arith.subf %156, %157 : vector<1x128xf32>
    %cst_46 = arith.constant 0.000000e+00 : f32
    %159 = vector.broadcast %cst_46 : f32 to vector<1x128xf32>
    %160 = arith.maximumf %158, %159 : vector<1x128xf32>
    %cst_47 = arith.constant 9.99999974E-6 : f32
    %161 = vector.broadcast %cst_47 : f32 to vector<1x128xf32>
    %162 = arith.addf %160, %161 : vector<1x128xf32>
    %163 = math.rsqrt %162 : vector<1x128xf32>
    %164 = vector.broadcast %155 : vector<1x128xf32> to vector<32x128xf32>
    %165 = arith.subf %149, %164 : vector<32x128xf32>
    %166 = arith.mulf %163, %5 : vector<1x128xf32>
    %167 = vector.broadcast %166 : vector<1x128xf32> to vector<32x128xf32>
    %168 = arith.mulf %165, %167 : vector<32x128xf32>
    %169 = vector.broadcast %6 : vector<1x128xf32> to vector<32x128xf32>
    %170 = arith.addf %168, %169 : vector<32x128xf32>
    %cst_48 = arith.constant 0.000000e+00 : f32
    %171 = vector.broadcast %cst_48 : f32 to vector<32x128xf32>
    %172 = arith.maximumf %170, %171 : vector<32x128xf32>
    %c1_i32_49 = arith.constant 1 : i32
    %173 = tpu.dynamic_rotate %172 by %c1_i32_49 dim 0 : vector<32x128xf32>, i32 -> vector<32x128xf32>
    %174 = vector.broadcast %14 : vector<32x1xf32> to vector<32x128xf32>
    %175 = arith.mulf %173, %174 : vector<32x128xf32>
    %c31_i32_50 = arith.constant 31 : i32
    %176 = tpu.dynamic_rotate %172 by %c31_i32_50 dim 0 : vector<32x128xf32>, i32 -> vector<32x128xf32>
    %177 = vector.broadcast %18 : vector<32x1xf32> to vector<32x128xf32>
    %178 = arith.mulf %176, %177 : vector<32x128xf32>
    %179 = arith.truncf %175 : vector<32x128xf32> to vector<32x128xbf16>
    %180 = arith.truncf %172 : vector<32x128xf32> to vector<32x128xbf16>
    %181 = arith.truncf %178 : vector<32x128xf32> to vector<32x128xbf16>
    %182 = tpu.concatenate %179, %180, %181 in 1 : vector<32x128xbf16>, vector<32x128xbf16>, vector<32x128xbf16> -> vector<32x384xbf16>
    %183 = arith.truncf %104 : vector<32x32xf32> to vector<32x32xbf16>
    %184 = tpu.concatenate %182, %183 in 1 : vector<32x384xbf16>, vector<32x32xbf16> -> vector<32x416xbf16>
    %cst_51 = arith.constant dense<0.000000e+00> : vector<32x32xf32>
    %185 = tpu.matmul %184, %2, %cst_51 {dimension_numbers = #tpu.dot_dimension_numbers<[1], [0], [0], [1], [0, 0, 1, 1], [], []>} : vector<32x416xbf16>, vector<416x32xbf16>, vector<32x32xf32> -> vector<32x32xf32>
    %186 = arith.addf %104, %185 : vector<32x32xf32>
    %187 = vector.broadcast %7 : vector<1x32xf32> to vector<32x32xf32>
    %188 = arith.addf %186, %187 : vector<32x32xf32>
    %c0_52 = arith.constant 0 : index
    %c0_53 = arith.constant 0 : index
    %189 = vector.load %arg9[%c0_52, %c0_53] : memref<32x32xf32, #tpu.memory_space<vmem>>, vector<32x32xf32>
    tpu.vector_store %arg9[%c0_52, %c0_53], %188 {strides = array<i32>} : memref<32x32xf32, #tpu.memory_space<vmem>>, vector<32x32xf32>,
    return
  }
}

</mosaic_0001>

<llo_original>
// kernel: tpu_custom_call.1
$region0: #{tpu_custom_call.1}
  #allocation0 [shape = 'u32[]', space=smem, size = 0x4, offset = 0x4, fixed_abs, tag = 'smem constant byte address 0x4 - core index']
  #allocation1 [shape = 'u32[144,128]{1,0:T(1,128)}', space=vmem, size = 0x12000, scoped, tag = 'internal scratch']
  %s0 = inlined_call_operand.vmem [shape: f32[32,32], index: 0, kind: input, shape index: {}]
  %s1 = inlined_call_operand.vmem [shape: bf16[96,128], index: 1, kind: input, shape index: {}]
  %s2 = inlined_call_operand.vmem [shape: bf16[384,128], index: 2, kind: input, shape index: {}]
  %s3 = inlined_call_operand.vmem [shape: bf16[416,32], index: 3, kind: input, shape index: {}]
  %s4 = inlined_call_operand.vmem [shape: f32[1,128], index: 4, kind: input, shape index: {}]
  %s5 = inlined_call_operand.vmem [shape: f32[1,128], index: 5, kind: input, shape index: {}]
  %s6 = inlined_call_operand.vmem [shape: f32[1,128], index: 6, kind: input, shape index: {}]
  %s7 = inlined_call_operand.vmem [shape: f32[1,128], index: 7, kind: input, shape index: {}]
  %s8 = inlined_call_operand.vmem [shape: f32[1,32], index: 8, kind: input, shape index: {}]
  %s9 = inlined_call_operand.hbm [shape: f32[32,32], index: 9, kind: output, shape index: {}]
  %s10 = sld [smem:[#allocation0]]
  $region46: #{tpu_custom_call.1} parent=0
    _
  %s12 = ssub.s32 1, %s10
  %s13 = scalar_select 0, %s12, %s10
  $region1: #{tpu_custom_call.1} parent=0
    #allocation2 [shape = 'u8[16384]{0}', space=vmem, size = 0x4000, scoped, tag = 'output window, operand 0, single buffered']
    #allocation3 [shape = 's32[1]{0}', space=sflag, size = 0x4, scoped, tag = 'scoped memory for tpu_custom_call.1']
    %14 = vsyncpa [#allocation3], 0
    // Predicated region
    $region2: #{tpu_custom_call.1} parent=1 // pred_check
      _
    $region3: #{tpu_custom_call.1} parent=1 // pred_check_branch
      %16 = sbr.rel (0) target = $region5
    $region4: #{tpu_custom_call.1} parent=1 // pred_region
      _
    $region5: #{tpu_custom_call.1} parent=1 // pred_fallthru
      _
    // Predicated region
    $region6: #{tpu_custom_call.1} parent=1 // pred_check
      _
    $region7: #{tpu_custom_call.1} parent=1 // pred_check_branch
      %18 = sbr.rel (0) target = $region9
    $region8: #{tpu_custom_call.1} parent=1 // pred_region
      _
    $region9: #{tpu_custom_call.1} parent=1 // pred_fallthru
      _
    // Predicated region
    $region10: #{tpu_custom_call.1} parent=1 // pred_check
      _
    $region11: #{tpu_custom_call.1} parent=1 // pred_check_branch
      %20 = sbr.rel (0) target = $region13
    $region12: #{tpu_custom_call.1} parent=1 // pred_region
      _
    $region13: #{tpu_custom_call.1} parent=1 // pred_fallthru
      _
    // Predicated region
    $region14: #{tpu_custom_call.1} parent=1 // pred_check
      _
    $region15: #{tpu_custom_call.1} parent=1 // pred_check_branch
      %22 = sbr.rel (0) target = $region17
    $region16: #{tpu_custom_call.1} parent=1 // pred_region
      _
    $region17: #{tpu_custom_call.1} parent=1 // pred_fallthru
      _
    // Predicated region
    $region18: #{tpu_custom_call.1} parent=1 // pred_check
      _
    $region19: #{tpu_custom_call.1} parent=1 // pred_check_branch
      %24 = sbr.rel (0) target = $region21
    $region20: #{tpu_custom_call.1} parent=1 // pred_region
      _
    $region21: #{tpu_custom_call.1} parent=1 // pred_fallthru
      _
    // Predicated region
    $region22: #{tpu_custom_call.1} parent=1 // pred_check
      _
    $region23: #{tpu_custom_call.1} parent=1 // pred_check_branch
      %26 = sbr.rel (0) target = $region25
    $region24: #{tpu_custom_call.1} parent=1 // pred_region
      _
    $region25: #{tpu_custom_call.1} parent=1 // pred_fallthru
      _
    // Predicated region
    $region26: #{tpu_custom_call.1} parent=1 // pred_check
      _
    $region27: #{tpu_custom_call.1} parent=1 // pred_check_branch
      %28 = sbr.rel (0) target = $region29
    $region28: #{tpu_custom_call.1} parent=1 // pred_region
      _
    $region29: #{tpu_custom_call.1} parent=1 // pred_fallthru
      _
    // Predicated region
    $region30: #{tpu_custom_call.1} parent=1 // pred_check
      _
    $region31: #{tpu_custom_call.1} parent=1 // pred_check_branch
      %30 = sbr.rel (0) target = $region33
    $region32: #{tpu_custom_call.1} parent=1 // pred_region
      _
    $region33: #{tpu_custom_call.1} parent=1 // pred_fallthru
      _
    // Predicated region
    $region34: #{tpu_custom_call.1} parent=1 // pred_check
      _
    $region35: #{tpu_custom_call.1} parent=1 // pred_check_branch
      %32 = sbr.rel (0) target = $region37
    $region36: #{tpu_custom_call.1} parent=1 // pred_region
      _
    $region37: #{tpu_custom_call.1} parent=1 // pred_fallthru
      _
    %v34 = vld [vmem:[%s1] sm:$0xf]
    %v35 = vld [vmem:[%s1 + $0x4] sm:$0xf]
    %v36 = vld [vmem:[%s1 + $0x8] sm:$0xf]
    %v37 = vld [vmem:[%s1 + $0xc] sm:$0xf]
    %v38 = vld [vmem:[%s1 + $0x10] sm:$0xf]
    %v39 = vld [vmem:[%s1 + $0x14] sm:$0xf]
    %v40 = vld [vmem:[%s1 + $0x18] sm:$0xf]
    %v41 = vld [vmem:[%s1 + $0x1c] sm:$0xf]
    %v42 = vld [vmem:[%s1 + $0x20] sm:$0xf]
    %v43 = vld [vmem:[%s1 + $0x24] sm:$0xf]
    %v44 = vld [vmem:[%s1 + $0x28] sm:$0xf]
    %v45 = vld [vmem:[%s1 + $0x2c] sm:$0xf]
    %v46 = vld [vmem:[%s2] sm:$0xf]
    %v47 = vld [vmem:[%s2 + $0x4] sm:$0xf]
    %v48 = vld [vmem:[%s2 + $0x8] sm:$0xf]
    %v49 = vld [vmem:[%s2 + $0xc] sm:$0xf]
    %v50 = vld [vmem:[%s2 + $0x10] sm:$0xf]
    %v51 = vld [vmem:[%s2 + $0x14] sm:$0xf]
    %v52 = vld [vmem:[%s2 + $0x18] sm:$0xf]
    %v53 = vld [vmem:[%s2 + $0x1c] sm:$0xf]
    %v54 = vld [vmem:[%s2 + $0x20] sm:$0xf]
    %v55 = vld [vmem:[%s2 + $0x24] sm:$0xf]
    %v56 = vld [vmem:[%s2 + $0x28] sm:$0xf]
    %v57 = vld [vmem:[%s2 + $0x2c] sm:$0xf]
    %v58 = vld [vmem:[%s2 + $0x30] sm:$0xf]
    %v59 = vld [vmem:[%s2 + $0x34] sm:$0xf]
    %v60 = vld [vmem:[%s2 + $0x38] sm:$0xf]
    %v61 = vld [vmem:[%s2 + $0x3c] sm:$0xf]
    %v62 = vld [vmem:[%s2 + $0x40] sm:$0xf]
    %v63 = vld [vmem:[%s2 + $0x44] sm:$0xf]
    %v64 = vld [vmem:[%s2 + $0x48] sm:$0xf]
    %v65 = vld [vmem:[%s2 + $0x4c] sm:$0xf]
    %v66 = vld [vmem:[%s2 + $0x50] sm:$0xf]
    %v67 = vld [vmem:[%s2 + $0x54] sm:$0xf]
    %v68 = vld [vmem:[%s2 + $0x58] sm:$0xf]
    %v69 = vld [vmem:[%s2 + $0x5c] sm:$0xf]
    %v70 = vld [vmem:[%s2 + $0x60] sm:$0xf]
    %v71 = vld [vmem:[%s2 + $0x64] sm:$0xf]
    %v72 = vld [vmem:[%s2 + $0x68] sm:$0xf]
    %v73 = vld [vmem:[%s2 + $0x6c] sm:$0xf]
    %v74 = vld [vmem:[%s2 + $0x70] sm:$0xf]
    %v75 = vld [vmem:[%s2 + $0x74] sm:$0xf]
    %v76 = vld [vmem:[%s2 + $0x78] sm:$0xf]
    %v77 = vld [vmem:[%s2 + $0x7c] sm:$0xf]
    %v78 = vld [vmem:[%s2 + $0x80] sm:$0xf]
    %v79 = vld [vmem:[%s2 + $0x84] sm:$0xf]
    %v80 = vld [vmem:[%s2 + $0x88] sm:$0xf]
    %v81 = vld [vmem:[%s2 + $0x8c] sm:$0xf]
    %v82 = vld [vmem:[%s2 + $0x90] sm:$0xf]
    %v83 = vld [vmem:[%s2 + $0x94] sm:$0xf]
    %v84 = vld [vmem:[%s2 + $0x98] sm:$0xf]
    %v85 = vld [vmem:[%s2 + $0x9c] sm:$0xf]
    %v86 = vld [vmem:[%s2 + $0xa0] sm:$0xf]
    %v87 = vld [vmem:[%s2 + $0xa4] sm:$0xf]
    %v88 = vld [vmem:[%s2 + $0xa8] sm:$0xf]
    %v89 = vld [vmem:[%s2 + $0xac] sm:$0xf]
    %v90 = vld [vmem:[%s2 + $0xb0] sm:$0xf]
    %v91 = vld [vmem:[%s2 + $0xb4] sm:$0xf]
    %v92 = vld [vmem:[%s2 + $0xb8] sm:$0xf]
    %v93 = vld [vmem:[%s2 + $0xbc] sm:$0xf]
    %v94 = vld [vmem:[%s3] sm:$0xf]
    %v95 = vld [vmem:[%s3 + $0x4] sm:$0xf]
    %v96 = vld [vmem:[%s3 + $0x8] sm:$0xf]
    %v97 = vld [vmem:[%s3 + $0xc] sm:$0xf]
    %v98 = vld [vmem:[%s3 + $0x10] sm:$0xf]
    %v99 = vld [vmem:[%s3 + $0x14] sm:$0xf]
    %v100 = vld [vmem:[%s3 + $0x18] sm:$0xf]
    %v101 = vld [vmem:[%s3 + $0x1c] sm:$0xf]
    %v102 = vld [vmem:[%s3 + $0x20] sm:$0xf]
    %v103 = vld [vmem:[%s3 + $0x24] sm:$0xf]
    %v104 = vld [vmem:[%s3 + $0x28] sm:$0xf]
    %v105 = vld [vmem:[%s3 + $0x2c] sm:$0xf]
    %v106 = vld [vmem:[%s3 + $0x30] sm:$0xf]
    %v107 = vld [vmem:[%s3 + $0x34] sm:$0xf]
    %v108 = vld [vmem:[%s3 + $0x38] sm:$0xf]
    %v109 = vld [vmem:[%s3 + $0x3c] sm:$0xf]
    %v110 = vld [vmem:[%s3 + $0x40] sm:$0xf]
    %v111 = vld [vmem:[%s3 + $0x44] sm:$0xf]
    %v112 = vld [vmem:[%s3 + $0x48] sm:$0xf]
    %v113 = vld [vmem:[%s3 + $0x4c] sm:$0xf]
    %v114 = vld [vmem:[%s3 + $0x50] sm:$0xf]
    %v115 = vld [vmem:[%s3 + $0x54] sm:$0xf]
    %v116 = vld [vmem:[%s3 + $0x58] sm:$0xf]
    %v117 = vld [vmem:[%s3 + $0x5c] sm:$0xf]
    %v118 = vld [vmem:[%s3 + $0x60] sm:$0xf]
    %v119 = vld [vmem:[%s3 + $0x64] sm:$0xf]
    %v120 = vld [vmem:[%s3 + $0x68] sm:$0xf]
    %v121 = vld [vmem:[%s3 + $0x6c] sm:$0xf]
    %v122 = vld [vmem:[%s3 + $0x70] sm:$0xf]
    %v123 = vld [vmem:[%s3 + $0x74] sm:$0xf]
    %v124 = vld [vmem:[%s3 + $0x78] sm:$0xf]
    %v125 = vld [vmem:[%s3 + $0x7c] sm:$0xf]
    %v126 = vld [vmem:[%s3 + $0x80] sm:$0xf]
    %v127 = vld [vmem:[%s3 + $0x84] sm:$0xf]
    %v128 = vld [vmem:[%s3 + $0x88] sm:$0xf]
    %v129 = vld [vmem:[%s3 + $0x8c] sm:$0xf]
    %v130 = vld [vmem:[%s3 + $0x90] sm:$0xf]
    %v131 = vld [vmem:[%s3 + $0x94] sm:$0xf]
    %v132 = vld [vmem:[%s3 + $0x98] sm:$0xf]
    %v133 = vld [vmem:[%s3 + $0x9c] sm:$0xf]
    %v134 = vld [vmem:[%s3 + $0xa0] sm:$0xf]
    %v135 = vld [vmem:[%s3 + $0xa4] sm:$0xf]
    %v136 = vld [vmem:[%s3 + $0xa8] sm:$0xf]
    %v137 = vld [vmem:[%s3 + $0xac] sm:$0xf]
    %v138 = vld [vmem:[%s3 + $0xb0] sm:$0xf]
    %v139 = vld [vmem:[%s3 + $0xb4] sm:$0xf]
    %v140 = vld [vmem:[%s3 + $0xb8] sm:$0xf]
    %v141 = vld [vmem:[%s3 + $0xbc] sm:$0xf]
    %v142 = vld [vmem:[%s3 + $0xc0] sm:$0xf]
    %v143 = vld [vmem:[%s3 + $0xc4] sm:$0xf]
    %v144 = vld [vmem:[%s3 + $0xc8] sm:$0xf]
    %v145 = vld [vmem:[%s3 + $0xcc] sm:$0xf]
    %v146 = vld [vmem:[%s4] sm:$0x1]
    %v147 = vld [vmem:[%s5] sm:$0x1]
    %v148 = vld [vmem:[%s6] sm:$0x1]
    %v149 = vld [vmem:[%s7] sm:$0x1]
    %v150 = vld [vmem:[%s8] sm:$0x1]
    %v151 = vlaneseq
    %v152 = vshrl.u32 %v151, 7
    %v153 = vadd.s32 %v152, 8
    %v154 = vadd.s32 %v152, 16
    %v155 = vadd.s32 %v152, 24
    %vm156 = vcmp.lt.s32.totalorder %v152, 0
    %v157 = vsub.s32 0, %v152
    %v158 = vsel %vm156, %v157, %v152
    %v159 = vshrl.u32 %v158, 4
    %v160 = vand.u32 %v158, 15
    %v161 = vsub.s32 0, %v160
    %v162 = vsel %vm156, %v161, %v160
    %vm163 = vcmp.lt.s32.totalorder %v153, 0
    %v164 = vsub.s32 0, %v153
    %v165 = vsel %vm163, %v164, %v153
    %v166 = vshrl.u32 %v165, 4
    %v167 = vand.u32 %v165, 15
    %v168 = vsub.s32 0, %v167
    %v169 = vsel %vm163, %v168, %v167
    %vm170 = vcmp.lt.s32.totalorder %v154, 0
    %v171 = vsub.s32 0, %v154
    %v172 = vsel %vm170, %v171, %v154
    %v173 = vshrl.u32 %v172, 4
    %v174 = vand.u32 %v172, 15
    %v175 = vsub.s32 0, %v174
    %v176 = vsel %vm170, %v175, %v174
    %vm177 = vcmp.lt.s32.totalorder %v155, 0
    %v178 = vsub.s32 0, %v155
    %v179 = vsel %vm177, %v178, %v155
    %v180 = vshrl.u32 %v179, 4
    %v181 = vand.u32 %v179, 15
    %v182 = vsub.s32 0, %v181
    %v183 = vsel %vm177, %v182, %v181
    %vm184 = vcmp.ne.s32.totalorder %v162, 0
    %vm185 = vcmp.ne.s32.totalorder %v169, 0
    %vm186 = vcmp.ne.s32.totalorder %v176, 0
    %vm187 = vcmp.ne.s32.totalorder %v183, 0
    %v188 = vsel %vm184, 1, 0
    %v189 = vsel %vm185, 1, 0
    %v190 = vsel %vm186, 1, 0
    %v191 = vsel %vm187, 1, 0
    %v192 = vcvt.s32.f32 %v188
    %v193 = vcvt.s32.f32 %v189
    %v194 = vcvt.s32.f32 %v190
    %v195 = vcvt.s32.f32 %v191
    %vm196 = vcmp.ne.s32.totalorder %v162, 15
    %vm197 = vcmp.ne.s32.totalorder %v169, 15
    %vm198 = vcmp.ne.s32.totalorder %v176, 15
    %vm199 = vcmp.ne.s32.totalorder %v183, 15
    %v200 = vsel %vm196, 1, 0
    %v201 = vsel %vm197, 1, 0
    %v202 = vsel %vm198, 1, 0
    %v203 = vsel %vm199, 1, 0
    %v204 = vcvt.s32.f32 %v200
    %v205 = vcvt.s32.f32 %v201
    %v206 = vcvt.s32.f32 %v202
    %v207 = vcvt.s32.f32 %v203
    %v208 = vld [vmem:[%s0] sm:$0xff]
    %v209 = vld [vmem:[%s0 + $0x8] sm:$0xff]
    %v210 = vld [vmem:[%s0 + $0x10] sm:$0xff]
    %v211 = vld [vmem:[%s0 + $0x18] sm:$0xff]
    %v212 = vrot.slane %v208, 7
    %v213 = vrot.slane %v209, 7
    %v214 = vrot.slane %v210, 7
    %v215 = vrot.slane %v211, 7
    %vm216 = vcmp.lt.s32.totalorder %v152, 1
    %v217 = vsel %vm216, %v214, %v215
    %v218 = vsel %vm216, %v213, %v214
    %v219 = vsel %vm216, %v212, %v213
    %v220 = vsel %vm216, %v215, %v212
    %v221 = vmul.f32 %v220, %v192
    %v222 = vmul.f32 %v219, %v193
    %v223 = vmul.f32 %v218, %v194
    %v224 = vmul.f32 %v217, %v195
    %v225 = vrot.slane %v208, 1
    %v226 = vrot.slane %v209, 1
    %v227 = vrot.slane %v210, 1
    %v228 = vrot.slane %v211, 1
    %vm229 = vcmp.lt.s32.totalorder %v152, 7
    %v230 = vsel %vm229, %v227, %v228
    %v231 = vsel %vm229, %v226, %v227
    %v232 = vsel %vm229, %v225, %v226
    %v233 = vsel %vm229, %v228, %v225
    %v234 = vmul.f32 %v232, %v204
    %v235 = vmul.f32 %v231, %v205
    %v236 = vmul.f32 %v230, %v206
    %v237 = vmul.f32 %v233, %v207
    %v238 = vpack.c.bf16 %v222, %v221
    %v239 = vpack.c.bf16 %v224, %v223
    %v240 = vpack.c.bf16 %v209, %v208
    %v241 = vpack.c.bf16 %v211, %v210
    %v242 = vpack.c.bf16 %v235, %v234
    %v243 = vpack.c.bf16 %v237, %v236
    %246 = vrot.lane.b32.xlu0 %v240, 32
    %v247 = vpop.permute.xlu0 %246
    %248 = vrot.lane.b32.xlu0 %v241, 32
    %v249 = vpop.permute.xlu0 %248
    %252 = vrot.lane.b32.xlu0 %v242, 64
    %v253 = vpop.permute.xlu0 %252
    %254 = vrot.lane.b32.xlu0 %v243, 64
    %v255 = vpop.permute.xlu0 %254
    %vm256 = vcmask 261120
    %v259 = vsel %vm256, %v238, %v247
    %v262 = vsel %vm256, %v239, %v249
    %vm263 = vcmask 523264
    %v265 = vsel %vm263, %v259, %v253
    %v267 = vsel %vm263, %v262, %v255
    %v280 = vunpack.c.l.b16 %v34
    %v281 = vunpack.c.l.b16 %v35
    %v282 = vunpack.c.l.b16 %v36
    %v283 = vunpack.c.l.b16 %v37
    %v284 = vunpack.c.l.b16 %v38
    %v285 = vunpack.c.l.b16 %v39
    %v286 = vunpack.c.l.b16 %v40
    %v287 = vunpack.c.l.b16 %v41
    %v288 = vunpack.c.l.b16 %v42
    %v289 = vunpack.c.l.b16 %v43
    %v290 = vunpack.c.l.b16 %v44
    %v291 = vunpack.c.l.b16 %v45
    %v292 = vpack.c.b16 %v281, %v280
    %v293 = vpack.c.b16 %v283, %v282
    %v294 = vpack.c.b16 %v285, %v284
    %v295 = vpack.c.b16 %v287, %v286
    %v296 = vpack.c.b16 %v289, %v288
    %v297 = vpack.c.b16 %v291, %v290
    %vm304 = vcmask 785408
    %v305 = vsel %vm304, %v265, 0
    %v307 = vsel %vm304, %v267, 0
    %309 = vmatprep.subr.bf16.mxu0 0
    %310 = vmatpush1.bf16.msra.mxu0 0
    %311 = vmatprep.subr.bf16.mxu0 0
    %312 = vmatpush1.bf16.msra.mxu0 0
    %313 = vmatprep.subr.bf16.mxu0 0
    %314 = vmatpush1.bf16.msra.mxu0 %v297
    %315 = vmatprep.subr.bf16.mxu0 0
    %316 = vmatpush1.bf16.msra.mxu0 %v296
    %317 = vmatprep.subr.bf16.mxu0 0
    %318 = vmatpush1.bf16.msra.mxu0 %v295
    %319 = vmatprep.subr.bf16.mxu0 0
    %320 = vmatpush1.bf16.msra.mxu0 %v294
    %321 = vmatprep.subr.bf16.mxu0 0
    %322 = vmatpush1.bf16.msra.mxu0 %v293
    %323 = vmatprep.subr.bf16.mxu0 0
    %324 = vmatpush1.bf16.msra.mxu0 %v292
    %325 = vmatprep.subr.bf16.mxu0 0
    %326 = vmatpush2.bf16.msra.mxu0 0
    %327 = vmatprep.subr.bf16.mxu0 0
    %328 = vmatpush2.bf16.msra.mxu0 0
    %329 = vmatprep.subr.bf16.mxu0 0
    %330 = vmatpush2.bf16.msra.mxu0 0
    %331 = vmatprep.subr.bf16.mxu0 0
    %332 = vmatpush2.bf16.msra.mxu0 0
    %333 = vmatprep.subr.bf16.mxu0 0
    %334 = vmatpush2.bf16.msra.mxu0 0
    %335 = vmatprep.subr.bf16.mxu0 0
    %336 = vmatpush2.bf16.msra.mxu0 0
    %337 = vmatprep.subr.bf16.mxu0 0
    %338 = vmatpush2.bf16.msra.mxu0 0
    %339 = vmatprep.subr.bf16.mxu0 0
    %340 = vmatpush2.bf16.msra.mxu0 0
    %341 = vmatprep.mubr.bf16.mxu0 0
    %342 = vmatmul.mubr.bf16.gmra.mxu0 %v305
    %v343 = vpop.f32.mrf.mxu0
    %v344 = vadd.f32 0.0, %v343
    %v345 = vpop.f32.mrf.mxu0
    %v346 = vpop.f32.mrf.mxu0
    %v347 = vadd.f32 0.0, %v346
    %v348 = vpop.f32.mrf.mxu0
    %349 = vmatprep.mubr.bf16.mxu0 0
    %350 = vmatmul.mubr.bf16.gmra.mxu0 %v307
    %v351 = vpop.f32.mrf.mxu0
    %v352 = vadd.f32 0.0, %v351
    %v353 = vpop.f32.mrf.mxu0
    %v354 = vpop.f32.mrf.mxu0
    %v355 = vadd.f32 0.0, %v354
    %v356 = vpop.f32.mrf.mxu0
    %357 = vdwg.mxu0
    %v358 = vmul.f32 %v344, %v344
    %v359 = vmul.f32 %v347, %v347
    %v360 = vmul.f32 %v352, %v352
    %v361 = vmul.f32 %v355, %v355
    %v363 = vsel %vm256, 1.0, 0
    %365 = vmatprep.subr.mxu0 0.0
    %366 = vmatpush1.msra.mxu0 0.0
    %367 = vmatprep.subr.mxu0 0.0
    %368 = vmatpush1.msra.mxu0 0.0
    %369 = vmatprep.subr.mxu0 0.0
    %370 = vmatpush1.msra.mxu0 0.0
    %371 = vmatprep.subr.mxu0 0.0
    %372 = vmatpush1.msra.mxu0 0.0
    %373 = vmatprep.subr.mxu0 0.0
    %374 = vmatpush1.msra.mxu0 0.0
    %375 = vmatprep.subr.mxu0 0.0
    %376 = vmatpush1.msra.mxu0 0.0
    %377 = vmatprep.subr.mxu0 0.0
    %378 = vmatpush1.msra.mxu0 0.0
    %379 = vmatprep.subr.mxu0 0.0
    %380 = vmatpush1.msra.mxu0 0.0
    %381 = vmatprep.subr.mxu0 0.0
    %382 = vmatpush1.msra.mxu0 0.0
    %383 = vmatprep.subr.mxu0 0.0
    %384 = vmatpush1.msra.mxu0 0.0
    %385 = vmatprep.subr.mxu0 0.0
    %386 = vmatpush1.msra.mxu0 0.0
    %387 = vmatprep.subr.mxu0 0.0
    %388 = vmatpush1.msra.mxu0 0.0
    %389 = vmatprep.subr.mxu0 %v361
    %390 = vmatpush1.msra.mxu0 %v355
    %391 = vmatprep.subr.mxu0 %v360
    %392 = vmatpush1.msra.mxu0 %v352
    %393 = vmatprep.subr.mxu0 %v359
    %394 = vmatpush1.msra.mxu0 %v347
    %395 = vmatprep.subr.mxu0 %v358
    %396 = vmatpush1.msra.mxu0 %v344
    %397 = vmatprep.subr.mxu0 0.0
    %398 = vmatpush2.msra.mxu0 0.0
    %399 = vmatprep.subr.mxu0 0.0
    %400 = vmatpush2.msra.mxu0 0.0
    %401 = vmatprep.subr.mxu0 0.0
    %402 = vmatpush2.msra.mxu0 0.0
    %403 = vmatprep.subr.mxu0 0.0
    %404 = vmatpush2.msra.mxu0 0.0
    %405 = vmatprep.subr.mxu0 0.0
    %406 = vmatpush2.msra.mxu0 0.0
    %407 = vmatprep.subr.mxu0 0.0
    %408 = vmatpush2.msra.mxu0 0.0
    %409 = vmatprep.subr.mxu0 0.0
    %410 = vmatpush2.msra.mxu0 0.0
    %411 = vmatprep.subr.mxu0 0.0
    %412 = vmatpush2.msra.mxu0 0.0
    %413 = vmatprep.subr.mxu0 0.0
    %414 = vmatpush2.msra.mxu0 0.0
    %415 = vmatprep.subr.mxu0 0.0
    %416 = vmatpush2.msra.mxu0 0.0
    %417 = vmatprep.subr.mxu0 0.0
    %418 = vmatpush2.msra.mxu0 0.0
    %419 = vmatprep.subr.mxu0 0.0
    %420 = vmatpush2.msra.mxu0 0.0
    %421 = vmatprep.subr.mxu0 0.0
    %422 = vmatpush2.msra.mxu0 0.0
    %423 = vmatprep.subr.mxu0 0.0
    %424 = vmatpush2.msra.mxu0 0.0
    %425 = vmatprep.subr.mxu0 0.0
    %426 = vmatpush2.msra.mxu0 0.0
    %427 = vmatprep.subr.mxu0 0.0
    %428 = vmatpush2.msra.mxu0 0.0
    %429 = vmatprep.mubr.f32.mxu0 0.0
    %430 = vmatmul.mubr.f32.gmra.mxu0 %v363
    %v431 = vpop.f32.mrf.mxu0
    %v432 = vadd.f32 0.0, %v431
    %v433 = vpop.f32.mrf.mxu0
    %v434 = vadd.f32 0.0, %v433
    %435 = vdwg.mxu0
    %v436 = vmul.f32 %v432, 0.03125
    %v437 = vmul.f32 %v434, 0.03125
    %v438 = vmul.f32 %v436, %v436
    %v439 = vsub.f32 %v437, %v438
    %v440 = vmax.f32 %v439, 0.0
    %v441 = vadd.f32 %v440, 1e-05
    %v442 = vrsqrt.pop %v441
    %v443 = vlaneseq
    %v444 = vshrl.u32 %v443, 7
    %v445 = vsub.s32 0, %v444
    %v446 = vrot.slane %v436, %v445
    %v447 = vsub.f32 %v344, %v446
    %v448 = vsub.f32 %v347, %v446
    %v449 = vsub.f32 %v352, %v446
    %v450 = vsub.f32 %v355, %v446
    %v451 = vmul.f32 %v442, %v146
    %v452 = vlaneseq
    %v453 = vshrl.u32 %v452, 7
    %v454 = vsub.s32 0, %v453
    %v455 = vrot.slane %v451, %v454
    %v456 = vmul.f32 %v447, %v455
    %v457 = vmul.f32 %v448, %v455
    %v458 = vmul.f32 %v449, %v455
    %v459 = vmul.f32 %v450, %v455
    %v461 = vlaneseq
    %v462 = vshrl.u32 %v461, 7
    %v463 = vsub.s32 0, %v462
    %v464 = vrot.slane %v147, %v463
    %v466 = vadd.f32 %v456, %v464
    %v467 = vadd.f32 %v457, %v464
    %v468 = vadd.f32 %v458, %v464
    %v469 = vadd.f32 %v459, %v464
    %v470 = vmax.f32 %v466, 0.0
    %v471 = vmax.f32 %v467, 0.0
    %v472 = vmax.f32 %v468, 0.0
    %v473 = vmax.f32 %v469, 0.0
    %v474 = vrot.slane %v470, 7
    %v475 = vrot.slane %v471, 7
    %v476 = vrot.slane %v472, 7
    %v477 = vrot.slane %v473, 7
    %v478 = vsel %vm216, %v476, %v477
    %v479 = vsel %vm216, %v475, %v476
    %v480 = vsel %vm216, %v474, %v475
    %v481 = vsel %vm216, %v477, %v474
    %v482 = vmul.f32 %v481, %v192
    %v483 = vmul.f32 %v480, %v193
    %v484 = vmul.f32 %v479, %v194
    %v485 = vmul.f32 %v478, %v195
    %v486 = vrot.slane %v470, 1
    %v487 = vrot.slane %v471, 1
    %v488 = vrot.slane %v472, 1
    %v489 = vrot.slane %v473, 1
    %v490 = vsel %vm229, %v488, %v489
    %v491 = vsel %vm229, %v487, %v488
    %v492 = vsel %vm229, %v486, %v487
    %v493 = vsel %vm229, %v489, %v486
    %v494 = vmul.f32 %v492, %v204
    %v495 = vmul.f32 %v491, %v205
    %v496 = vmul.f32 %v490, %v206
    %v497 = vmul.f32 %v493, %v207
    %v498 = vpack.c.bf16 %v483, %v482
    %v499 = vpack.c.bf16 %v485, %v484
    %v500 = vpack.c.bf16 %v471, %v470
    %v501 = vpack.c.bf16 %v473, %v472
    %v502 = vpack.c.bf16 %v495, %v494
    %v503 = vpack.c.bf16 %v497, %v496
    %v552 = vunpack.c.l.b16 %v46
    %v553 = vunpack.c.l.b16 %v47
    %v554 = vunpack.c.l.b16 %v48
    %v555 = vunpack.c.l.b16 %v49
    %v556 = vunpack.c.l.b16 %v50
    %v557 = vunpack.c.l.b16 %v51
    %v558 = vunpack.c.l.b16 %v52
    %v559 = vunpack.c.l.b16 %v53
    %v560 = vunpack.c.l.b16 %v54
    %v561 = vunpack.c.l.b16 %v55
    %v562 = vunpack.c.l.b16 %v56
    %v563 = vunpack.c.l.b16 %v57
    %v564 = vunpack.c.l.b16 %v58
    %v565 = vunpack.c.l.b16 %v59
    %v566 = vunpack.c.l.b16 %v60
    %v567 = vunpack.c.l.b16 %v61
    %v568 = vunpack.c.l.b16 %v62
    %v569 = vunpack.c.l.b16 %v63
    %v570 = vunpack.c.l.b16 %v64
    %v571 = vunpack.c.l.b16 %v65
    %v572 = vunpack.c.l.b16 %v66
    %v573 = vunpack.c.l.b16 %v67
    %v574 = vunpack.c.l.b16 %v68
    %v575 = vunpack.c.l.b16 %v69
    %v576 = vunpack.c.l.b16 %v70
    %v577 = vunpack.c.l.b16 %v71
    %v578 = vunpack.c.l.b16 %v72
    %v579 = vunpack.c.l.b16 %v73
    %v580 = vunpack.c.l.b16 %v74
    %v581 = vunpack.c.l.b16 %v75
    %v582 = vunpack.c.l.b16 %v76
    %v583 = vunpack.c.l.b16 %v77
    %v584 = vunpack.c.l.b16 %v78
    %v585 = vunpack.c.l.b16 %v79
    %v586 = vunpack.c.l.b16 %v80
    %v587 = vunpack.c.l.b16 %v81
    %v588 = vunpack.c.l.b16 %v82
    %v589 = vunpack.c.l.b16 %v83
    %v590 = vunpack.c.l.b16 %v84
    %v591 = vunpack.c.l.b16 %v85
    %v592 = vunpack.c.l.b16 %v86
    %v593 = vunpack.c.l.b16 %v87
    %v594 = vunpack.c.l.b16 %v88
    %v595 = vunpack.c.l.b16 %v89
    %v596 = vunpack.c.l.b16 %v90
    %v597 = vunpack.c.l.b16 %v91
    %v598 = vunpack.c.l.b16 %v92
    %v599 = vunpack.c.l.b16 %v93
    %v600 = vpack.c.b16 %v553, %v552
    %v601 = vpack.c.b16 %v555, %v554
    %v602 = vpack.c.b16 %v557, %v556
    %v603 = vpack.c.b16 %v559, %v558
    %v604 = vpack.c.b16 %v561, %v560
    %v605 = vpack.c.b16 %v563, %v562
    %v606 = vpack.c.b16 %v565, %v564
    %v607 = vpack.c.b16 %v567, %v566
    %v608 = vpack.c.b16 %v569, %v568
    %v609 = vpack.c.b16 %v571, %v570
    %v610 = vpack.c.b16 %v573, %v572
    %v611 = vpack.c.b16 %v575, %v574
    %v612 = vpack.c.b16 %v577, %v576
    %v613 = vpack.c.b16 %v579, %v578
    %v614 = vpack.c.b16 %v581, %v580
    %v615 = vpack.c.b16 %v583, %v582
    %v616 = vpack.c.b16 %v585, %v584
    %v617 = vpack.c.b16 %v587, %v586
    %v618 = vpack.c.b16 %v589, %v588
    %v619 = vpack.c.b16 %v591, %v590
    %v620 = vpack.c.b16 %v593, %v592
    %v621 = vpack.c.b16 %v595, %v594
    %v622 = vpack.c.b16 %v597, %v596
    %v623 = vpack.c.b16 %v599, %v598
    %648 = vmatprep.subr.bf16.mxu0 0
    %649 = vmatpush1.bf16.msra.mxu0 %v607
    %650 = vmatprep.subr.bf16.mxu0 0
    %651 = vmatpush1.bf16.msra.mxu0 %v606
    %652 = vmatprep.subr.bf16.mxu0 0
    %653 = vmatpush1.bf16.msra.mxu0 %v605
    %654 = vmatprep.subr.bf16.mxu0 0
    %655 = vmatpush1.bf16.msra.mxu0 %v604
    %656 = vmatprep.subr.bf16.mxu0 0
    %657 = vmatpush1.bf16.msra.mxu0 %v603
    %658 = vmatprep.subr.bf16.mxu0 0
    %659 = vmatpush1.bf16.msra.mxu0 %v602
    %660 = vmatprep.subr.bf16.mxu0 0
    %661 = vmatpush1.bf16.msra.mxu0 %v601
    %662 = vmatprep.subr.bf16.mxu0 0
    %663 = vmatpush1.bf16.msra.mxu0 %v600
    %664 = vmatprep.subr.bf16.mxu0 0
    %665 = vmatpush2.bf16.msra.mxu0 %v615
    %666 = vmatprep.subr.bf16.mxu0 0
    %667 = vmatpush2.bf16.msra.mxu0 %v614
    %668 = vmatprep.subr.bf16.mxu0 0
    %669 = vmatpush2.bf16.msra.mxu0 %v613
    %670 = vmatprep.subr.bf16.mxu0 0
    %671 = vmatpush2.bf16.msra.mxu0 %v612
    %672 = vmatprep.subr.bf16.mxu0 0
    %673 = vmatpush2.bf16.msra.mxu0 %v611
    %674 = vmatprep.subr.bf16.mxu0 0
    %675 = vmatpush2.bf16.msra.mxu0 %v610
    %676 = vmatprep.subr.bf16.mxu0 0
    %677 = vmatpush2.bf16.msra.mxu0 %v609
    %678 = vmatprep.subr.bf16.mxu0 0
    %679 = vmatpush2.bf16.msra.mxu0 %v608
    %680 = vmatprep.mubr.bf16.mxu0 %v500
    %681 = vmatmul.mubr.bf16.gmra.mxu0 %v498
    %v682 = vpop.f32.mrf.mxu0
    %v683 = vadd.f32 0.0, %v682
    %v684 = vpop.f32.mrf.mxu0
    %v685 = vpop.f32.mrf.mxu0
    %v686 = vadd.f32 0.0, %v685
    %v687 = vpop.f32.mrf.mxu0
    %688 = vmatprep.mubr.bf16.mxu0 %v501
    %689 = vmatmul.mubr.bf16.gmra.mxu0 %v499
    %v690 = vpop.f32.mrf.mxu0
    %v691 = vadd.f32 0.0, %v690
    %v692 = vpop.f32.mrf.mxu0
    %v693 = vpop.f32.mrf.mxu0
    %v694 = vadd.f32 0.0, %v693
    %v695 = vpop.f32.mrf.mxu0
    %696 = vdwg.mxu0
    %697 = vmatprep.subr.bf16.mxu0 0
    %698 = vmatpush1.bf16.msra.mxu0 %v623
    %699 = vmatprep.subr.bf16.mxu0 0
    %700 = vmatpush1.bf16.msra.mxu0 %v622
    %701 = vmatprep.subr.bf16.mxu0 0
    %702 = vmatpush1.bf16.msra.mxu0 %v621
    %703 = vmatprep.subr.bf16.mxu0 0
    %704 = vmatpush1.bf16.msra.mxu0 %v620
    %705 = vmatprep.subr.bf16.mxu0 0
    %706 = vmatpush1.bf16.msra.mxu0 %v619
    %707 = vmatprep.subr.bf16.mxu0 0
    %708 = vmatpush1.bf16.msra.mxu0 %v618
    %709 = vmatprep.subr.bf16.mxu0 0
    %710 = vmatpush1.bf16.msra.mxu0 %v617
    %711 = vmatprep.subr.bf16.mxu0 0
    %712 = vmatpush1.bf16.msra.mxu0 %v616
    %713 = vmatprep.subr.bf16.mxu0 0
    %714 = vmatpush2.bf16.msra.mxu0 0
    %715 = vmatprep.subr.bf16.mxu0 0
    %716 = vmatpush2.bf16.msra.mxu0 0
    %717 = vmatprep.subr.bf16.mxu0 0
    %718 = vmatpush2.bf16.msra.mxu0 0
    %719 = vmatprep.subr.bf16.mxu0 0
    %720 = vmatpush2.bf16.msra.mxu0 0
    %721 = vmatprep.subr.bf16.mxu0 0
    %722 = vmatpush2.bf16.msra.mxu0 0
    %723 = vmatprep.subr.bf16.mxu0 0
    %724 = vmatpush2.bf16.msra.mxu0 0
    %725 = vmatprep.subr.bf16.mxu0 0
    %726 = vmatpush2.bf16.msra.mxu0 0
    %727 = vmatprep.subr.bf16.mxu0 0
    %728 = vmatpush2.bf16.msra.mxu0 0
    %729 = vmatprep.mubr.bf16.mxu0 0
    %730 = vmatmul.mubr.bf16.gmra.mxu0 %v502
    %v731 = vpop.f32.mrf.mxu0
    %v732 = vadd.f32 %v683, %v731
    %v733 = vpop.f32.mrf.mxu0
    %v734 = vpop.f32.mrf.mxu0
    %v735 = vadd.f32 %v686, %v734
    %v736 = vpop.f32.mrf.mxu0
    %737 = vmatprep.mubr.bf16.mxu0 0
    %738 = vmatmul.mubr.bf16.gmra.mxu0 %v503
    %v739 = vpop.f32.mrf.mxu0
    %v740 = vadd.f32 %v691, %v739
    %v741 = vpop.f32.mrf.mxu0
    %v742 = vpop.f32.mrf.mxu0
    %v743 = vadd.f32 %v694, %v742
    %v744 = vpop.f32.mrf.mxu0
    %745 = vdwg.mxu0
    %v746 = vmul.f32 %v732, %v732
    %v747 = vmul.f32 %v735, %v735
    %v748 = vmul.f32 %v740, %v740
    %v749 = vmul.f32 %v743, %v743
    %750 = vmatprep.subr.mxu0 0.0
    %751 = vmatpush1.msra.mxu0 0.0
    %752 = vmatprep.subr.mxu0 0.0
    %753 = vmatpush1.msra.mxu0 0.0
    %754 = vmatprep.subr.mxu0 0.0
    %755 = vmatpush1.msra.mxu0 0.0
    %756 = vmatprep.subr.mxu0 0.0
    %757 = vmatpush1.msra.mxu0 0.0
    %758 = vmatprep.subr.mxu0 0.0
    %759 = vmatpush1.msra.mxu0 0.0
    %760 = vmatprep.subr.mxu0 0.0
    %761 = vmatpush1.msra.mxu0 0.0
    %762 = vmatprep.subr.mxu0 0.0
    %763 = vmatpush1.msra.mxu0 0.0
    %764 = vmatprep.subr.mxu0 0.0
    %765 = vmatpush1.msra.mxu0 0.0
    %766 = vmatprep.subr.mxu0 0.0
    %767 = vmatpush1.msra.mxu0 0.0
    %768 = vmatprep.subr.mxu0 0.0
    %769 = vmatpush1.msra.mxu0 0.0
    %770 = vmatprep.subr.mxu0 0.0
    %771 = vmatpush1.msra.mxu0 0.0
    %772 = vmatprep.subr.mxu0 0.0
    %773 = vmatpush1.msra.mxu0 0.0
    %774 = vmatprep.subr.mxu0 %v749
    %775 = vmatpush1.msra.mxu0 %v743
    %776 = vmatprep.subr.mxu0 %v748
    %777 = vmatpush1.msra.mxu0 %v740
    %778 = vmatprep.subr.mxu0 %v747
    %779 = vmatpush1.msra.mxu0 %v735
    %780 = vmatprep.subr.mxu0 %v746
    %781 = vmatpush1.msra.mxu0 %v732
    %782 = vmatprep.subr.mxu0 0.0
    %783 = vmatpush2.msra.mxu0 0.0
    %784 = vmatprep.subr.mxu0 0.0
    %785 = vmatpush2.msra.mxu0 0.0
    %786 = vmatprep.subr.mxu0 0.0
    %787 = vmatpush2.msra.mxu0 0.0
    %788 = vmatprep.subr.mxu0 0.0
    %789 = vmatpush2.msra.mxu0 0.0
    %790 = vmatprep.subr.mxu0 0.0
    %791 = vmatpush2.msra.mxu0 0.0
    %792 = vmatprep.subr.mxu0 0.0
    %793 = vmatpush2.msra.mxu0 0.0
    %794 = vmatprep.subr.mxu0 0.0
    %795 = vmatpush2.msra.mxu0 0.0
    %796 = vmatprep.subr.mxu0 0.0
    %797 = vmatpush2.msra.mxu0 0.0
    %798 = vmatprep.subr.mxu0 0.0
    %799 = vmatpush2.msra.mxu0 0.0
    %800 = vmatprep.subr.mxu0 0.0
    %801 = vmatpush2.msra.mxu0 0.0
    %802 = vmatprep.subr.mxu0 0.0
    %803 = vmatpush2.msra.mxu0 0.0
    %804 = vmatprep.subr.mxu0 0.0
    %805 = vmatpush2.msra.mxu0 0.0
    %806 = vmatprep.subr.mxu0 0.0
    %807 = vmatpush2.msra.mxu0 0.0
    %808 = vmatprep.subr.mxu0 0.0
    %809 = vmatpush2.msra.mxu0 0.0
    %810 = vmatprep.subr.mxu0 0.0
    %811 = vmatpush2.msra.mxu0 0.0
    %812 = vmatprep.subr.mxu0 0.0
    %813 = vmatpush2.msra.mxu0 0.0
    %814 = vmatprep.mubr.f32.mxu0 0.0
    %815 = vmatmul.mubr.f32.gmra.mxu0 %v363
    %v816 = vpop.f32.mrf.mxu0
    %v817 = vadd.f32 0.0, %v816
    %v818 = vpop.f32.mrf.mxu0
    %v819 = vadd.f32 0.0, %v818
    %820 = vdwg.mxu0
    %v821 = vmul.f32 %v817, 0.03125
    %v822 = vmul.f32 %v819, 0.03125
    %v823 = vmul.f32 %v821, %v821
    %v824 = vsub.f32 %v822, %v823
    %v825 = vmax.f32 %v824, 0.0
    %v826 = vadd.f32 %v825, 1e-05
    %v827 = vrsqrt.pop %v826
    %v828 = vlaneseq
    %v829 = vshrl.u32 %v828, 7
    %v830 = vsub.s32 0, %v829
    %v831 = vrot.slane %v821, %v830
    %v832 = vsub.f32 %v732, %v831
    %v833 = vsub.f32 %v735, %v831
    %v834 = vsub.f32 %v740, %v831
    %v835 = vsub.f32 %v743, %v831
    %v836 = vmul.f32 %v827, %v148
    %v837 = vlaneseq
    %v838 = vshrl.u32 %v837, 7
    %v839 = vsub.s32 0, %v838
    %v840 = vrot.slane %v836, %v839
    %v841 = vmul.f32 %v832, %v840
    %v842 = vmul.f32 %v833, %v840
    %v843 = vmul.f32 %v834, %v840
    %v844 = vmul.f32 %v835, %v840
    %v846 = vlaneseq
    %v847 = vshrl.u32 %v846, 7
    %v848 = vsub.s32 0, %v847
    %v849 = vrot.slane %v149, %v848
    %v851 = vadd.f32 %v841, %v849
    %v852 = vadd.f32 %v842, %v849
    %v853 = vadd.f32 %v843, %v849
    %v854 = vadd.f32 %v844, %v849
    %v855 = vmax.f32 %v851, 0.0
    %v856 = vmax.f32 %v852, 0.0
    %v857 = vmax.f32 %v853, 0.0
    %v858 = vmax.f32 %v854, 0.0
    %v859 = vrot.slane %v855, 7
    %v860 = vrot.slane %v856, 7
    %v861 = vrot.slane %v857, 7
    %v862 = vrot.slane %v858, 7
    %v863 = vsel %vm216, %v861, %v862
    %v864 = vsel %vm216, %v860, %v861
    %v865 = vsel %vm216, %v859, %v860
    %v866 = vsel %vm216, %v862, %v859
    %v867 = vmul.f32 %v866, %v192
    %v868 = vmul.f32 %v865, %v193
    %v869 = vmul.f32 %v864, %v194
    %v870 = vmul.f32 %v863, %v195
    %v871 = vrot.slane %v855, 1
    %v872 = vrot.slane %v856, 1
    %v873 = vrot.slane %v857, 1
    %v874 = vrot.slane %v858, 1
    %v875 = vsel %vm229, %v873, %v874
    %v876 = vsel %vm229, %v872, %v873
    %v877 = vsel %vm229, %v871, %v872
    %v878 = vsel %vm229, %v874, %v871
    %v879 = vmul.f32 %v877, %v204
    %v880 = vmul.f32 %v876, %v205
    %v881 = vmul.f32 %v875, %v206
    %v882 = vmul.f32 %v878, %v207
    %v883 = vpack.c.bf16 %v868, %v867
    %v884 = vpack.c.bf16 %v870, %v869
    %v885 = vpack.c.bf16 %v856, %v855
    %v886 = vpack.c.bf16 %v858, %v857
    %v887 = vpack.c.bf16 %v880, %v879
    %v888 = vpack.c.bf16 %v882, %v881
    %v941 = vunpack.c.l.b16 %v94
    %v942 = vunpack.c.l.b16 %v95
    %v943 = vunpack.c.l.b16 %v96
    %v944 = vunpack.c.l.b16 %v97
    %v945 = vunpack.c.l.b16 %v98
    %v946 = vunpack.c.l.b16 %v99
    %v947 = vunpack.c.l.b16 %v100
    %v948 = vunpack.c.l.b16 %v101
    %v949 = vunpack.c.l.b16 %v102
    %v950 = vunpack.c.l.b16 %v103
    %v951 = vunpack.c.l.b16 %v104
    %v952 = vunpack.c.l.b16 %v105
    %v953 = vunpack.c.l.b16 %v106
    %v954 = vunpack.c.l.b16 %v107
    %v955 = vunpack.c.l.b16 %v108
    %v956 = vunpack.c.l.b16 %v109
    %v957 = vunpack.c.l.b16 %v110
    %v958 = vunpack.c.l.b16 %v111
    %v959 = vunpack.c.l.b16 %v112
    %v960 = vunpack.c.l.b16 %v113
    %v961 = vunpack.c.l.b16 %v114
    %v962 = vunpack.c.l.b16 %v115
    %v963 = vunpack.c.l.b16 %v116
    %v964 = vunpack.c.l.b16 %v117
    %v965 = vunpack.c.l.b16 %v118
    %v966 = vunpack.c.l.b16 %v119
    %v967 = vunpack.c.l.b16 %v120
    %v968 = vunpack.c.l.b16 %v121
    %v969 = vunpack.c.l.b16 %v122
    %v970 = vunpack.c.l.b16 %v123
    %v971 = vunpack.c.l.b16 %v124
    %v972 = vunpack.c.l.b16 %v125
    %v973 = vunpack.c.l.b16 %v126
    %v974 = vunpack.c.l.b16 %v127
    %v975 = vunpack.c.l.b16 %v128
    %v976 = vunpack.c.l.b16 %v129
    %v977 = vunpack.c.l.b16 %v130
    %v978 = vunpack.c.l.b16 %v131
    %v979 = vunpack.c.l.b16 %v132
    %v980 = vunpack.c.l.b16 %v133
    %v981 = vunpack.c.l.b16 %v134
    %v982 = vunpack.c.l.b16 %v135
    %v983 = vunpack.c.l.b16 %v136
    %v984 = vunpack.c.l.b16 %v137
    %v985 = vunpack.c.l.b16 %v138
    %v986 = vunpack.c.l.b16 %v139
    %v987 = vunpack.c.l.b16 %v140
    %v988 = vunpack.c.l.b16 %v141
    %v989 = vunpack.c.l.b16 %v142
    %v990 = vunpack.c.l.b16 %v143
    %v991 = vunpack.c.l.b16 %v144
    %v992 = vunpack.c.l.b16 %v145
    %v993 = vpack.c.b16 %v942, %v941
    %v994 = vpack.c.b16 %v944, %v943
    %v995 = vpack.c.b16 %v946, %v945
    %v996 = vpack.c.b16 %v948, %v947
    %v997 = vpack.c.b16 %v950, %v949
    %v998 = vpack.c.b16 %v952, %v951
    %v999 = vpack.c.b16 %v954, %v953
    %v1000 = vpack.c.b16 %v956, %v955
    %v1001 = vpack.c.b16 %v958, %v957
    %v1002 = vpack.c.b16 %v960, %v959
    %v1003 = vpack.c.b16 %v962, %v961
    %v1004 = vpack.c.b16 %v964, %v963
    %v1005 = vpack.c.b16 %v966, %v965
    %v1006 = vpack.c.b16 %v968, %v967
    %v1007 = vpack.c.b16 %v970, %v969
    %v1008 = vpack.c.b16 %v972, %v971
    %v1009 = vpack.c.b16 %v974, %v973
    %v1010 = vpack.c.b16 %v976, %v975
    %v1011 = vpack.c.b16 %v978, %v977
    %v1012 = vpack.c.b16 %v980, %v979
    %v1013 = vpack.c.b16 %v982, %v981
    %v1014 = vpack.c.b16 %v984, %v983
    %v1015 = vpack.c.b16 %v986, %v985
    %v1016 = vpack.c.b16 %v988, %v987
    %v1017 = vpack.c.b16 %v990, %v989
    %v1018 = vpack.c.b16 %v992, %v991
    %v1046 = vsel %vm256, %v240, 0
    %v1049 = vsel %vm256, %v241, 0
    %1051 = vmatprep.subr.bf16.mxu0 0
    %1052 = vmatpush1.bf16.msra.mxu0 %v1000
    %1053 = vmatprep.subr.bf16.mxu0 0
    %1054 = vmatpush1.bf16.msra.mxu0 %v999
    %1055 = vmatprep.subr.bf16.mxu0 0
    %1056 = vmatpush1.bf16.msra.mxu0 %v998
    %1057 = vmatprep.subr.bf16.mxu0 0
    %1058 = vmatpush1.bf16.msra.mxu0 %v997
    %1059 = vmatprep.subr.bf16.mxu0 0
    %1060 = vmatpush1.bf16.msra.mxu0 %v996
    %1061 = vmatprep.subr.bf16.mxu0 0
    %1062 = vmatpush1.bf16.msra.mxu0 %v995
    %1063 = vmatprep.subr.bf16.mxu0 0
    %1064 = vmatpush1.bf16.msra.mxu0 %v994
    %1065 = vmatprep.subr.bf16.mxu0 0
    %1066 = vmatpush1.bf16.msra.mxu0 %v993
    %1067 = vmatprep.subr.bf16.mxu0 0
    %1068 = vmatpush2.bf16.msra.mxu0 %v1008
    %1069 = vmatprep.subr.bf16.mxu0 0
    %1070 = vmatpush2.bf16.msra.mxu0 %v1007
    %1071 = vmatprep.subr.bf16.mxu0 0
    %1072 = vmatpush2.bf16.msra.mxu0 %v1006
    %1073 = vmatprep.subr.bf16.mxu0 0
    %1074 = vmatpush2.bf16.msra.mxu0 %v1005
    %1075 = vmatprep.subr.bf16.mxu0 0
    %1076 = vmatpush2.bf16.msra.mxu0 %v1004
    %1077 = vmatprep.subr.bf16.mxu0 0
    %1078 = vmatpush2.bf16.msra.mxu0 %v1003
    %1079 = vmatprep.subr.bf16.mxu0 0
    %1080 = vmatpush2.bf16.msra.mxu0 %v1002
    %1081 = vmatprep.subr.bf16.mxu0 0
    %1082 = vmatpush2.bf16.msra.mxu0 %v1001
    %1083 = vmatprep.mubr.bf16.mxu0 %v885
    %1084 = vmatmul.mubr.bf16.gmra.mxu0 %v883
    %v1085 = vpop.f32.mrf.mxu0
    %v1086 = vadd.f32 0.0, %v1085
    %v1087 = vpop.f32.mrf.mxu0
    %v1088 = vpop.f32.mrf.mxu0
    %v1089 = vadd.f32 0.0, %v1088
    %v1090 = vpop.f32.mrf.mxu0
    %1091 = vmatprep.mubr.bf16.mxu0 %v886
    %1092 = vmatmul.mubr.bf16.gmra.mxu0 %v884
    %v1093 = vpop.f32.mrf.mxu0
    %v1094 = vadd.f32 0.0, %v1093
    %v1095 = vpop.f32.mrf.mxu0
    %v1096 = vpop.f32.mrf.mxu0
    %v1097 = vadd.f32 0.0, %v1096
    %v1098 = vpop.f32.mrf.mxu0
    %1099 = vdwg.mxu0
    %1100 = vmatprep.subr.bf16.mxu0 0
    %1101 = vmatpush1.bf16.msra.mxu0 %v1016
    %1102 = vmatprep.subr.bf16.mxu0 0
    %1103 = vmatpush1.bf16.msra.mxu0 %v1015
    %1104 = vmatprep.subr.bf16.mxu0 0
    %1105 = vmatpush1.bf16.msra.mxu0 %v1014
    %1106 = vmatprep.subr.bf16.mxu0 0
    %1107 = vmatpush1.bf16.msra.mxu0 %v1013
    %1108 = vmatprep.subr.bf16.mxu0 0
    %1109 = vmatpush1.bf16.msra.mxu0 %v1012
    %1110 = vmatprep.subr.bf16.mxu0 0
    %1111 = vmatpush1.bf16.msra.mxu0 %v1011
    %1112 = vmatprep.subr.bf16.mxu0 0
    %1113 = vmatpush1.bf16.msra.mxu0 %v1010
    %1114 = vmatprep.subr.bf16.mxu0 0
    %1115 = vmatpush1.bf16.msra.mxu0 %v1009
    %1116 = vmatprep.subr.bf16.mxu0 0
    %1117 = vmatpush2.bf16.msra.mxu0 0
    %1118 = vmatprep.subr.bf16.mxu0 0
    %1119 = vmatpush2.bf16.msra.mxu0 0
    %1120 = vmatprep.subr.bf16.mxu0 0
    %1121 = vmatpush2.bf16.msra.mxu0 0
    %1122 = vmatprep.subr.bf16.mxu0 0
    %1123 = vmatpush2.bf16.msra.mxu0 0
    %1124 = vmatprep.subr.bf16.mxu0 0
    %1125 = vmatpush2.bf16.msra.mxu0 0
    %1126 = vmatprep.subr.bf16.mxu0 0
    %1127 = vmatpush2.bf16.msra.mxu0 0
    %1128 = vmatprep.subr.bf16.mxu0 0
    %1129 = vmatpush2.bf16.msra.mxu0 %v1018
    %1130 = vmatprep.subr.bf16.mxu0 0
    %1131 = vmatpush2.bf16.msra.mxu0 %v1017
    %1132 = vmatprep.mubr.bf16.mxu0 %v1046
    %1133 = vmatmul.mubr.bf16.gmra.mxu0 %v887
    %v1134 = vpop.f32.mrf.mxu0
    %v1135 = vadd.f32 %v1086, %v1134
    %v1136 = vpop.f32.mrf.mxu0
    %v1137 = vpop.f32.mrf.mxu0
    %v1138 = vadd.f32 %v1089, %v1137
    %v1139 = vpop.f32.mrf.mxu0
    %1140 = vmatprep.mubr.bf16.mxu0 %v1049
    %1141 = vmatmul.mubr.bf16.gmra.mxu0 %v888
    %v1142 = vpop.f32.mrf.mxu0
    %v1143 = vadd.f32 %v1094, %v1142
    %v1144 = vpop.f32.mrf.mxu0
    %v1145 = vpop.f32.mrf.mxu0
    %v1146 = vadd.f32 %v1097, %v1145
    %v1147 = vpop.f32.mrf.mxu0
    %1148 = vdwg.mxu0
    %v1149 = vadd.f32 %v208, %v1135
    %v1150 = vadd.f32 %v209, %v1138
    %v1151 = vadd.f32 %v210, %v1143
    %v1152 = vadd.f32 %v211, %v1146
    %v1154 = vlaneseq
    %v1155 = vshrl.u32 %v1154, 7
    %v1156 = vsub.s32 0, %v1155
    %v1157 = vrot.slane %v150, %v1156
    %v1159 = vadd.f32 %v1149, %v1157
    %v1160 = vadd.f32 %v1150, %v1157
    %v1161 = vadd.f32 %v1151, %v1157
    %v1162 = vadd.f32 %v1152, %v1157
    %v1163 = vrot.slane %v1159, 7
    %v1164 = vrot.slane %v1160, 7
    %v1165 = vrot.slane %v1161, 7
    %v1166 = vrot.slane %v1162, 7
    %v1167 = vsel %vm216, %v1165, %v1166
    %v1168 = vsel %vm216, %v1164, %v1165
    %v1169 = vsel %vm216, %v1163, %v1164
    %v1170 = vsel %vm216, %v1166, %v1163
    %v1171 = vmul.f32 %v1170, %v192
    %v1172 = vmul.f32 %v1169, %v193
    %v1173 = vmul.f32 %v1168, %v194
    %v1174 = vmul.f32 %v1167, %v195
    %v1175 = vrot.slane %v1159, 1
    %v1176 = vrot.slane %v1160, 1
    %v1177 = vrot.slane %v1161, 1
    %v1178 = vrot.slane %v1162, 1
    %v1179 = vsel %vm229, %v1177, %v1178
    %v1180 = vsel %vm229, %v1176, %v1177
    %v1181 = vsel %vm229, %v1175, %v1176
    %v1182 = vsel %vm229, %v1178, %v1175
    %v1183 = vmul.f32 %v1181, %v204
    %v1184 = vmul.f32 %v1180, %v205
    %v1185 = vmul.f32 %v1179, %v206
    %v1186 = vmul.f32 %v1182, %v207
    %v1187 = vpack.c.bf16 %v1172, %v1171
    %v1188 = vpack.c.bf16 %v1174, %v1173
    %v1189 = vpack.c.bf16 %v1160, %v1159
    %v1190 = vpack.c.bf16 %v1162, %v1161
    %v1191 = vpack.c.bf16 %v1184, %v1183
    %v1192 = vpack.c.bf16 %v1186, %v1185
    %1195 = vrot.lane.b32.xlu0 %v1189, 32
    %v1196 = vpop.permute.xlu0 %1195
    %1197 = vrot.lane.b32.xlu0 %v1190, 32
    %v1198 = vpop.permute.xlu0 %1197
    %1201 = vrot.lane.b32.xlu0 %v1191, 64
    %v1202 = vpop.permute.xlu0 %1201
    %1203 = vrot.lane.b32.xlu0 %v1192, 64
    %v1204 = vpop.permute.xlu0 %1203
    %v1207 = vsel %vm256, %v1187, %v1196
    %v1210 = vsel %vm256, %v1188, %v1198
    %v1212 = vsel %vm263, %v1207, %v1202
    %v1214 = vsel %vm263, %v1210, %v1204
    %v1215 = vsel %vm304, %v1212, 0
    %v1217 = vsel %vm304, %v1214, 0
    %1219 = vmatprep.subr.bf16.mxu0 0
    %1220 = vmatpush1.bf16.msra.mxu0 0
    %1221 = vmatprep.subr.bf16.mxu0 0
    %1222 = vmatpush1.bf16.msra.mxu0 0
    %1223 = vmatprep.subr.bf16.mxu0 0
    %1224 = vmatpush1.bf16.msra.mxu0 %v297
    %1225 = vmatprep.subr.bf16.mxu0 0
    %1226 = vmatpush1.bf16.msra.mxu0 %v296
    %1227 = vmatprep.subr.bf16.mxu0 0
    %1228 = vmatpush1.bf16.msra.mxu0 %v295
    %1229 = vmatprep.subr.bf16.mxu0 0
    %1230 = vmatpush1.bf16.msra.mxu0 %v294
    %1231 = vmatprep.subr.bf16.mxu0 0
    %1232 = vmatpush1.bf16.msra.mxu0 %v293
    %1233 = vmatprep.subr.bf16.mxu0 0
    %1234 = vmatpush1.bf16.msra.mxu0 %v292
    %1235 = vmatprep.subr.bf16.mxu0 0
    %1236 = vmatpush2.bf16.msra.mxu0 0
    %1237 = vmatprep.subr.bf16.mxu0 0
    %1238 = vmatpush2.bf16.msra.mxu0 0
    %1239 = vmatprep.subr.bf16.mxu0 0
    %1240 = vmatpush2.bf16.msra.mxu0 0
    %1241 = vmatprep.subr.bf16.mxu0 0
    %1242 = vmatpush2.bf16.msra.mxu0 0
    %1243 = vmatprep.subr.bf16.mxu0 0
    %1244 = vmatpush2.bf16.msra.mxu0 0
    %1245 = vmatprep.subr.bf16.mxu0 0
    %1246 = vmatpush2.bf16.msra.mxu0 0
    %1247 = vmatprep.subr.bf16.mxu0 0
    %1248 = vmatpush2.bf16.msra.mxu0 0
    %1249 = vmatprep.subr.bf16.mxu0 0
    %1250 = vmatpush2.bf16.msra.mxu0 0
    %1251 = vmatprep.mubr.bf16.mxu0 0
    %1252 = vmatmul.mubr.bf16.gmra.mxu0 %v1215
    %v1253 = vpop.f32.mrf.mxu0
    %v1254 = vadd.f32 0.0, %v1253
    %v1255 = vpop.f32.mrf.mxu0
    %v1256 = vpop.f32.mrf.mxu0
    %v1257 = vadd.f32 0.0, %v1256
    %v1258 = vpop.f32.mrf.mxu0
    %1259 = vmatprep.mubr.bf16.mxu0 0
    %1260 = vmatmul.mubr.bf16.gmra.mxu0 %v1217
    %v1261 = vpop.f32.mrf.mxu0
    %v1262 = vadd.f32 0.0, %v1261
    %v1263 = vpop.f32.mrf.mxu0
    %v1264 = vpop.f32.mrf.mxu0
    %v1265 = vadd.f32 0.0, %v1264
    %v1266 = vpop.f32.mrf.mxu0
    %1267 = vdwg.mxu0
    %v1268 = vmul.f32 %v1254, %v1254
    %v1269 = vmul.f32 %v1257, %v1257
    %v1270 = vmul.f32 %v1262, %v1262
    %v1271 = vmul.f32 %v1265, %v1265
    %1272 = vmatprep.subr.mxu0 0.0
    %1273 = vmatpush1.msra.mxu0 0.0
    %1274 = vmatprep.subr.mxu0 0.0
    %1275 = vmatpush1.msra.mxu0 0.0
    %1276 = vmatprep.subr.mxu0 0.0
    %1277 = vmatpush1.msra.mxu0 0.0
    %1278 = vmatprep.subr.mxu0 0.0
    %1279 = vmatpush1.msra.mxu0 0.0
    %1280 = vmatprep.subr.mxu0 0.0
    %1281 = vmatpush1.msra.mxu0 0.0
    %1282 = vmatprep.subr.mxu0 0.0
    %1283 = vmatpush1.msra.mxu0 0.0
    %1284 = vmatprep.subr.mxu0 0.0
    %1285 = vmatpush1.msra.mxu0 0.0
    %1286 = vmatprep.subr.mxu0 0.0
    %1287 = vmatpush1.msra.mxu0 0.0
    %1288 = vmatprep.subr.mxu0 0.0
    %1289 = vmatpush1.msra.mxu0 0.0
    %1290 = vmatprep.subr.mxu0 0.0
    %1291 = vmatpush1.msra.mxu0 0.0
    %1292 = vmatprep.subr.mxu0 0.0
    %1293 = vmatpush1.msra.mxu0 0.0
    %1294 = vmatprep.subr.mxu0 0.0
    %1295 = vmatpush1.msra.mxu0 0.0
    %1296 = vmatprep.subr.mxu0 %v1271
    %1297 = vmatpush1.msra.mxu0 %v1265
    %1298 = vmatprep.subr.mxu0 %v1270
    %1299 = vmatpush1.msra.mxu0 %v1262
    %1300 = vmatprep.subr.mxu0 %v1269
    %1301 = vmatpush1.msra.mxu0 %v1257
    %1302 = vmatprep.subr.mxu0 %v1268
    %1303 = vmatpush1.msra.mxu0 %v1254
    %1304 = vmatprep.subr.mxu0 0.0
    %1305 = vmatpush2.msra.mxu0 0.0
    %1306 = vmatprep.subr.mxu0 0.0
    %1307 = vmatpush2.msra.mxu0 0.0
    %1308 = vmatprep.subr.mxu0 0.0
    %1309 = vmatpush2.msra.mxu0 0.0
    %1310 = vmatprep.subr.mxu0 0.0
    %1311 = vmatpush2.msra.mxu0 0.0
    %1312 = vmatprep.subr.mxu0 0.0
    %1313 = vmatpush2.msra.mxu0 0.0
    %1314 = vmatprep.subr.mxu0 0.0
    %1315 = vmatpush2.msra.mxu0 0.0
    %1316 = vmatprep.subr.mxu0 0.0
    %1317 = vmatpush2.msra.mxu0 0.0
    %1318 = vmatprep.subr.mxu0 0.0
    %1319 = vmatpush2.msra.mxu0 0.0
    %1320 = vmatprep.subr.mxu0 0.0
    %1321 = vmatpush2.msra.mxu0 0.0
    %1322 = vmatprep.subr.mxu0 0.0
    %1323 = vmatpush2.msra.mxu0 0.0
    %1324 = vmatprep.subr.mxu0 0.0
    %1325 = vmatpush2.msra.mxu0 0.0
    %1326 = vmatprep.subr.mxu0 0.0
    %1327 = vmatpush2.msra.mxu0 0.0
    %1328 = vmatprep.subr.mxu0 0.0
    %1329 = vmatpush2.msra.mxu0 0.0
    %1330 = vmatprep.subr.mxu0 0.0
    %1331 = vmatpush2.msra.mxu0 0.0
    %1332 = vmatprep.subr.mxu0 0.0
    %1333 = vmatpush2.msra.mxu0 0.0
    %1334 = vmatprep.subr.mxu0 0.0
    %1335 = vmatpush2.msra.mxu0 0.0
    %1336 = vmatprep.mubr.f32.mxu0 0.0
    %1337 = vmatmul.mubr.f32.gmra.mxu0 %v363
    %v1338 = vpop.f32.mrf.mxu0
    %v1339 = vadd.f32 0.0, %v1338
    %v1340 = vpop.f32.mrf.mxu0
    %v1341 = vadd.f32 0.0, %v1340
    %1342 = vdwg.mxu0
    %v1343 = vmul.f32 %v1339, 0.03125
    %v1344 = vmul.f32 %v1341, 0.03125
    %v1345 = vmul.f32 %v1343, %v1343
    %v1346 = vsub.f32 %v1344, %v1345
    %v1347 = vmax.f32 %v1346, 0.0
    %v1348 = vadd.f32 %v1347, 1e-05
    %v1349 = vrsqrt.pop %v1348
    %v1350 = vlaneseq
    %v1351 = vshrl.u32 %v1350, 7
    %v1352 = vsub.s32 0, %v1351
    %v1353 = vrot.slane %v1343, %v1352
    %v1354 = vsub.f32 %v1254, %v1353
    %v1355 = vsub.f32 %v1257, %v1353
    %v1356 = vsub.f32 %v1262, %v1353
    %v1357 = vsub.f32 %v1265, %v1353
    %v1358 = vmul.f32 %v1349, %v146
    %v1359 = vlaneseq
    %v1360 = vshrl.u32 %v1359, 7
    %v1361 = vsub.s32 0, %v1360
    %v1362 = vrot.slane %v1358, %v1361
    %v1363 = vmul.f32 %v1354, %v1362
    %v1364 = vmul.f32 %v1355, %v1362
    %v1365 = vmul.f32 %v1356, %v1362
    %v1366 = vmul.f32 %v1357, %v1362
    %v1367 = vadd.f32 %v1363, %v464
    %v1368 = vadd.f32 %v1364, %v464
    %v1369 = vadd.f32 %v1365, %v464
    %v1370 = vadd.f32 %v1366, %v464
    %v1371 = vmax.f32 %v1367, 0.0
    %v1372 = vmax.f32 %v1368, 0.0
    %v1373 = vmax.f32 %v1369, 0.0
    %v1374 = vmax.f32 %v1370, 0.0
    %v1375 = vrot.slane %v1371, 7
    %v1376 = vrot.slane %v1372, 7
    %v1377 = vrot.slane %v1373, 7
    %v1378 = vrot.slane %v1374, 7
    %v1379 = vsel %vm216, %v1377, %v1378
    %v1380 = vsel %vm216, %v1376, %v1377
    %v1381 = vsel %vm216, %v1375, %v1376
    %v1382 = vsel %vm216, %v1378, %v1375
    %v1383 = vmul.f32 %v1382, %v192
    %v1384 = vmul.f32 %v1381, %v193
    %v1385 = vmul.f32 %v1380, %v194
    %v1386 = vmul.f32 %v1379, %v195
    %v1387 = vrot.slane %v1371, 1
    %v1388 = vrot.slane %v1372, 1
    %v1389 = vrot.slane %v1373, 1
    %v1390 = vrot.slane %v1374, 1
    %v1391 = vsel %vm229, %v1389, %v1390
    %v1392 = vsel %vm229, %v1388, %v1389
    %v1393 = vsel %vm229, %v1387, %v1388
    %v1394 = vsel %vm229, %v1390, %v1387
    %v1395 = vmul.f32 %v1393, %v204
    %v1396 = vmul.f32 %v1392, %v205
    %v1397 = vmul.f32 %v1391, %v206
    %v1398 = vmul.f32 %v1394, %v207
    %v1399 = vpack.c.bf16 %v1384, %v1383
    %v1400 = vpack.c.bf16 %v1386, %v1385
    %v1401 = vpack.c.bf16 %v1372, %v1371
    %v1402 = vpack.c.bf16 %v1374, %v1373
    %v1403 = vpack.c.bf16 %v1396, %v1395
    %v1404 = vpack.c.bf16 %v1398, %v1397
    %1405 = vmatprep.subr.bf16.mxu0 0
    %1406 = vmatpush1.bf16.msra.mxu0 %v607
    %1407 = vmatprep.subr.bf16.mxu0 0
    %1408 = vmatpush1.bf16.msra.mxu0 %v606
    %1409 = vmatprep.subr.bf16.mxu0 0
    %1410 = vmatpush1.bf16.msra.mxu0 %v605
    %1411 = vmatprep.subr.bf16.mxu0 0
    %1412 = vmatpush1.bf16.msra.mxu0 %v604
    %1413 = vmatprep.subr.bf16.mxu0 0
    %1414 = vmatpush1.bf16.msra.mxu0 %v603
    %1415 = vmatprep.subr.bf16.mxu0 0
    %1416 = vmatpush1.bf16.msra.mxu0 %v602
    %1417 = vmatprep.subr.bf16.mxu0 0
    %1418 = vmatpush1.bf16.msra.mxu0 %v601
    %1419 = vmatprep.subr.bf16.mxu0 0
    %1420 = vmatpush1.bf16.msra.mxu0 %v600
    %1421 = vmatprep.subr.bf16.mxu0 0
    %1422 = vmatpush2.bf16.msra.mxu0 %v615
    %1423 = vmatprep.subr.bf16.mxu0 0
    %1424 = vmatpush2.bf16.msra.mxu0 %v614
    %1425 = vmatprep.subr.bf16.mxu0 0
    %1426 = vmatpush2.bf16.msra.mxu0 %v613
    %1427 = vmatprep.subr.bf16.mxu0 0
    %1428 = vmatpush2.bf16.msra.mxu0 %v612
    %1429 = vmatprep.subr.bf16.mxu0 0
    %1430 = vmatpush2.bf16.msra.mxu0 %v611
    %1431 = vmatprep.subr.bf16.mxu0 0
    %1432 = vmatpush2.bf16.msra.mxu0 %v610
    %1433 = vmatprep.subr.bf16.mxu0 0
    %1434 = vmatpush2.bf16.msra.mxu0 %v609
    %1435 = vmatprep.subr.bf16.mxu0 0
    %1436 = vmatpush2.bf16.msra.mxu0 %v608
    %1437 = vmatprep.mubr.bf16.mxu0 %v1401
    %1438 = vmatmul.mubr.bf16.gmra.mxu0 %v1399
    %v1439 = vpop.f32.mrf.mxu0
    %v1440 = vadd.f32 0.0, %v1439
    %v1441 = vpop.f32.mrf.mxu0
    %v1442 = vpop.f32.mrf.mxu0
    %v1443 = vadd.f32 0.0, %v1442
    %v1444 = vpop.f32.mrf.mxu0
    %1445 = vmatprep.mubr.bf16.mxu0 %v1402
    %1446 = vmatmul.mubr.bf16.gmra.mxu0 %v1400
    %v1447 = vpop.f32.mrf.mxu0
    %v1448 = vadd.f32 0.0, %v1447
    %v1449 = vpop.f32.mrf.mxu0
    %v1450 = vpop.f32.mrf.mxu0
    %v1451 = vadd.f32 0.0, %v1450
    %v1452 = vpop.f32.mrf.mxu0
    %1453 = vdwg.mxu0
    %1454 = vmatprep.subr.bf16.mxu0 0
    %1455 = vmatpush1.bf16.msra.mxu0 %v623
    %1456 = vmatprep.subr.bf16.mxu0 0
    %1457 = vmatpush1.bf16.msra.mxu0 %v622
    %1458 = vmatprep.subr.bf16.mxu0 0
    %1459 = vmatpush1.bf16.msra.mxu0 %v621
    %1460 = vmatprep.subr.bf16.mxu0 0
    %1461 = vmatpush1.bf16.msra.mxu0 %v620
    %1462 = vmatprep.subr.bf16.mxu0 0
    %1463 = vmatpush1.bf16.msra.mxu0 %v619
    %1464 = vmatprep.subr.bf16.mxu0 0
    %1465 = vmatpush1.bf16.msra.mxu0 %v618
    %1466 = vmatprep.subr.bf16.mxu0 0
    %1467 = vmatpush1.bf16.msra.mxu0 %v617
    %1468 = vmatprep.subr.bf16.mxu0 0
    %1469 = vmatpush1.bf16.msra.mxu0 %v616
    %1470 = vmatprep.subr.bf16.mxu0 0
    %1471 = vmatpush2.bf16.msra.mxu0 0
    %1472 = vmatprep.subr.bf16.mxu0 0
    %1473 = vmatpush2.bf16.msra.mxu0 0
    %1474 = vmatprep.subr.bf16.mxu0 0
    %1475 = vmatpush2.bf16.msra.mxu0 0
    %1476 = vmatprep.subr.bf16.mxu0 0
    %1477 = vmatpush2.bf16.msra.mxu0 0
    %1478 = vmatprep.subr.bf16.mxu0 0
    %1479 = vmatpush2.bf16.msra.mxu0 0
    %1480 = vmatprep.subr.bf16.mxu0 0
    %1481 = vmatpush2.bf16.msra.mxu0 0
    %1482 = vmatprep.subr.bf16.mxu0 0
    %1483 = vmatpush2.bf16.msra.mxu0 0
    %1484 = vmatprep.subr.bf16.mxu0 0
    %1485 = vmatpush2.bf16.msra.mxu0 0
    %1486 = vmatprep.mubr.bf16.mxu0 0
    %1487 = vmatmul.mubr.bf16.gmra.mxu0 %v1403
    %v1488 = vpop.f32.mrf.mxu0
    %v1489 = vadd.f32 %v1440, %v1488
    %v1490 = vpop.f32.mrf.mxu0
    %v1491 = vpop.f32.mrf.mxu0
    %v1492 = vadd.f32 %v1443, %v1491
    %v1493 = vpop.f32.mrf.mxu0
    %1494 = vmatprep.mubr.bf16.mxu0 0
    %1495 = vmatmul.mubr.bf16.gmra.mxu0 %v1404
    %v1496 = vpop.f32.mrf.mxu0
    %v1497 = vadd.f32 %v1448, %v1496
    %v1498 = vpop.f32.mrf.mxu0
    %v1499 = vpop.f32.mrf.mxu0
    %v1500 = vadd.f32 %v1451, %v1499
    %v1501 = vpop.f32.mrf.mxu0
    %1502 = vdwg.mxu0
    %v1503 = vmul.f32 %v1489, %v1489
    %v1504 = vmul.f32 %v1492, %v1492
    %v1505 = vmul.f32 %v1497, %v1497
    %v1506 = vmul.f32 %v1500, %v1500
    %1507 = vmatprep.subr.mxu0 0.0
    %1508 = vmatpush1.msra.mxu0 0.0
    %1509 = vmatprep.subr.mxu0 0.0
    %1510 = vmatpush1.msra.mxu0 0.0
    %1511 = vmatprep.subr.mxu0 0.0
    %1512 = vmatpush1.msra.mxu0 0.0
    %1513 = vmatprep.subr.mxu0 0.0
    %1514 = vmatpush1.msra.mxu0 0.0
    %1515 = vmatprep.subr.mxu0 0.0
    %1516 = vmatpush1.msra.mxu0 0.0
    %1517 = vmatprep.subr.mxu0 0.0
    %1518 = vmatpush1.msra.mxu0 0.0
    %1519 = vmatprep.subr.mxu0 0.0
    %1520 = vmatpush1.msra.mxu0 0.0
    %1521 = vmatprep.subr.mxu0 0.0
    %1522 = vmatpush1.msra.mxu0 0.0
    %1523 = vmatprep.subr.mxu0 0.0
    %1524 = vmatpush1.msra.mxu0 0.0
    %1525 = vmatprep.subr.mxu0 0.0
    %1526 = vmatpush1.msra.mxu0 0.0
    %1527 = vmatprep.subr.mxu0 0.0
    %1528 = vmatpush1.msra.mxu0 0.0
    %1529 = vmatprep.subr.mxu0 0.0
    %1530 = vmatpush1.msra.mxu0 0.0
    %1531 = vmatprep.subr.mxu0 %v1506
    %1532 = vmatpush1.msra.mxu0 %v1500
    %1533 = vmatprep.subr.mxu0 %v1505
    %1534 = vmatpush1.msra.mxu0 %v1497
    %1535 = vmatprep.subr.mxu0 %v1504
    %1536 = vmatpush1.msra.mxu0 %v1492
    %1537 = vmatprep.subr.mxu0 %v1503
    %1538 = vmatpush1.msra.mxu0 %v1489
    %1539 = vmatprep.subr.mxu0 0.0
    %1540 = vmatpush2.msra.mxu0 0.0
    %1541 = vmatprep.subr.mxu0 0.0
    %1542 = vmatpush2.msra.mxu0 0.0
    %1543 = vmatprep.subr.mxu0 0.0
    %1544 = vmatpush2.msra.mxu0 0.0
    %1545 = vmatprep.subr.mxu0 0.0
    %1546 = vmatpush2.msra.mxu0 0.0
    %1547 = vmatprep.subr.mxu0 0.0
    %1548 = vmatpush2.msra.mxu0 0.0
    %1549 = vmatprep.subr.mxu0 0.0
    %1550 = vmatpush2.msra.mxu0 0.0
    %1551 = vmatprep.subr.mxu0 0.0
    %1552 = vmatpush2.msra.mxu0 0.0
    %1553 = vmatprep.subr.mxu0 0.0
    %1554 = vmatpush2.msra.mxu0 0.0
    %1555 = vmatprep.subr.mxu0 0.0
    %1556 = vmatpush2.msra.mxu0 0.0
    %1557 = vmatprep.subr.mxu0 0.0
    %1558 = vmatpush2.msra.mxu0 0.0
    %1559 = vmatprep.subr.mxu0 0.0
    %1560 = vmatpush2.msra.mxu0 0.0
    %1561 = vmatprep.subr.mxu0 0.0
    %1562 = vmatpush2.msra.mxu0 0.0
    %1563 = vmatprep.subr.mxu0 0.0
    %1564 = vmatpush2.msra.mxu0 0.0
    %1565 = vmatprep.subr.mxu0 0.0
    %1566 = vmatpush2.msra.mxu0 0.0
    %1567 = vmatprep.subr.mxu0 0.0
    %1568 = vmatpush2.msra.mxu0 0.0
    %1569 = vmatprep.subr.mxu0 0.0
    %1570 = vmatpush2.msra.mxu0 0.0
    %1571 = vmatprep.mubr.f32.mxu0 0.0
    %1572 = vmatmul.mubr.f32.gmra.mxu0 %v363
    %v1573 = vpop.f32.mrf.mxu0
    %v1574 = vadd.f32 0.0, %v1573
    %v1575 = vpop.f32.mrf.mxu0
    %v1576 = vadd.f32 0.0, %v1575
    %1577 = vdwg.mxu0
    %v1578 = vmul.f32 %v1574, 0.03125
    %v1579 = vmul.f32 %v1576, 0.03125
    %v1580 = vmul.f32 %v1578, %v1578
    %v1581 = vsub.f32 %v1579, %v1580
    %v1582 = vmax.f32 %v1581, 0.0
    %v1583 = vadd.f32 %v1582, 1e-05
    %v1584 = vrsqrt.pop %v1583
    %v1585 = vlaneseq
    %v1586 = vshrl.u32 %v1585, 7
    %v1587 = vsub.s32 0, %v1586
    %v1588 = vrot.slane %v1578, %v1587
    %v1589 = vsub.f32 %v1489, %v1588
    %v1590 = vsub.f32 %v1492, %v1588
    %v1591 = vsub.f32 %v1497, %v1588
    %v1592 = vsub.f32 %v1500, %v1588
    %v1593 = vmul.f32 %v1584, %v148
    %v1594 = vlaneseq
    %v1595 = vshrl.u32 %v1594, 7
    %v1596 = vsub.s32 0, %v1595
    %v1597 = vrot.slane %v1593, %v1596
    %v1598 = vmul.f32 %v1589, %v1597
    %v1599 = vmul.f32 %v1590, %v1597
    %v1600 = vmul.f32 %v1591, %v1597
    %v1601 = vmul.f32 %v1592, %v1597
    %v1602 = vadd.f32 %v1598, %v849
    %v1603 = vadd.f32 %v1599, %v849
    %v1604 = vadd.f32 %v1600, %v849
    %v1605 = vadd.f32 %v1601, %v849
    %v1606 = vmax.f32 %v1602, 0.0
    %v1607 = vmax.f32 %v1603, 0.0
    %v1608 = vmax.f32 %v1604, 0.0
    %v1609 = vmax.f32 %v1605, 0.0
    %v1610 = vrot.slane %v1606, 7
    %v1611 = vrot.slane %v1607, 7
    %v1612 = vrot.slane %v1608, 7
    %v1613 = vrot.slane %v1609, 7
    %v1614 = vsel %vm216, %v1612, %v1613
    %v1615 = vsel %vm216, %v1611, %v1612
    %v1616 = vsel %vm216, %v1610, %v1611
    %v1617 = vsel %vm216, %v1613, %v1610
    %v1618 = vmul.f32 %v1617, %v192
    %v1619 = vmul.f32 %v1616, %v193
    %v1620 = vmul.f32 %v1615, %v194
    %v1621 = vmul.f32 %v1614, %v195
    %v1622 = vrot.slane %v1606, 1
    %v1623 = vrot.slane %v1607, 1
    %v1624 = vrot.slane %v1608, 1
    %v1625 = vrot.slane %v1609, 1
    %v1626 = vsel %vm229, %v1624, %v1625
    %v1627 = vsel %vm229, %v1623, %v1624
    %v1628 = vsel %vm229, %v1622, %v1623
    %v1629 = vsel %vm229, %v1625, %v1622
    %v1630 = vmul.f32 %v1628, %v204
    %v1631 = vmul.f32 %v1627, %v205
    %v1632 = vmul.f32 %v1626, %v206
    %v1633 = vmul.f32 %v1629, %v207
    %v1634 = vpack.c.bf16 %v1619, %v1618
    %v1635 = vpack.c.bf16 %v1621, %v1620
    %v1636 = vpack.c.bf16 %v1607, %v1606
    %v1637 = vpack.c.bf16 %v1609, %v1608
    %v1638 = vpack.c.bf16 %v1631, %v1630
    %v1639 = vpack.c.bf16 %v1633, %v1632
    %v1641 = vsel %vm256, %v1189, 0
    %v1644 = vsel %vm256, %v1190, 0
    %1646 = vmatprep.subr.bf16.mxu0 0
    %1647 = vmatpush1.bf16.msra.mxu0 %v1000
    %1648 = vmatprep.subr.bf16.mxu0 0
    %1649 = vmatpush1.bf16.msra.mxu0 %v999
    %1650 = vmatprep.subr.bf16.mxu0 0
    %1651 = vmatpush1.bf16.msra.mxu0 %v998
    %1652 = vmatprep.subr.bf16.mxu0 0
    %1653 = vmatpush1.bf16.msra.mxu0 %v997
    %1654 = vmatprep.subr.bf16.mxu0 0
    %1655 = vmatpush1.bf16.msra.mxu0 %v996
    %1656 = vmatprep.subr.bf16.mxu0 0
    %1657 = vmatpush1.bf16.msra.mxu0 %v995
    %1658 = vmatprep.subr.bf16.mxu0 0
    %1659 = vmatpush1.bf16.msra.mxu0 %v994
    %1660 = vmatprep.subr.bf16.mxu0 0
    %1661 = vmatpush1.bf16.msra.mxu0 %v993
    %1662 = vmatprep.subr.bf16.mxu0 0
    %1663 = vmatpush2.bf16.msra.mxu0 %v1008
    %1664 = vmatprep.subr.bf16.mxu0 0
    %1665 = vmatpush2.bf16.msra.mxu0 %v1007
    %1666 = vmatprep.subr.bf16.mxu0 0
    %1667 = vmatpush2.bf16.msra.mxu0 %v1006
    %1668 = vmatprep.subr.bf16.mxu0 0
    %1669 = vmatpush2.bf16.msra.mxu0 %v1005
    %1670 = vmatprep.subr.bf16.mxu0 0
    %1671 = vmatpush2.bf16.msra.mxu0 %v1004
    %1672 = vmatprep.subr.bf16.mxu0 0
    %1673 = vmatpush2.bf16.msra.mxu0 %v1003
    %1674 = vmatprep.subr.bf16.mxu0 0
    %1675 = vmatpush2.bf16.msra.mxu0 %v1002
    %1676 = vmatprep.subr.bf16.mxu0 0
    %1677 = vmatpush2.bf16.msra.mxu0 %v1001
    %1678 = vmatprep.mubr.bf16.mxu0 %v1636
    %1679 = vmatmul.mubr.bf16.gmra.mxu0 %v1634
    %v1680 = vpop.f32.mrf.mxu0
    %v1681 = vadd.f32 0.0, %v1680
    %v1682 = vpop.f32.mrf.mxu0
    %v1683 = vpop.f32.mrf.mxu0
    %v1684 = vadd.f32 0.0, %v1683
    %v1685 = vpop.f32.mrf.mxu0
    %1686 = vmatprep.mubr.bf16.mxu0 %v1637
    %1687 = vmatmul.mubr.bf16.gmra.mxu0 %v1635
    %v1688 = vpop.f32.mrf.mxu0
    %v1689 = vadd.f32 0.0, %v1688
    %v1690 = vpop.f32.mrf.mxu0
    %v1691 = vpop.f32.mrf.mxu0
    %v1692 = vadd.f32 0.0, %v1691
    %v1693 = vpop.f32.mrf.mxu0
    %1694 = vdwg.mxu0
    %1695 = vmatprep.subr.bf16.mxu0 0
    %1696 = vmatpush1.bf16.msra.mxu0 %v1016
    %1697 = vmatprep.subr.bf16.mxu0 0
    %1698 = vmatpush1.bf16.msra.mxu0 %v1015
    %1699 = vmatprep.subr.bf16.mxu0 0
    %1700 = vmatpush1.bf16.msra.mxu0 %v1014
    %1701 = vmatprep.subr.bf16.mxu0 0
    %1702 = vmatpush1.bf16.msra.mxu0 %v1013
    %1703 = vmatprep.subr.bf16.mxu0 0
    %1704 = vmatpush1.bf16.msra.mxu0 %v1012
    %1705 = vmatprep.subr.bf16.mxu0 0
    %1706 = vmatpush1.bf16.msra.mxu0 %v1011
    %1707 = vmatprep.subr.bf16.mxu0 0
    %1708 = vmatpush1.bf16.msra.mxu0 %v1010
    %1709 = vmatprep.subr.bf16.mxu0 0
    %1710 = vmatpush1.bf16.msra.mxu0 %v1009
    %1711 = vmatprep.subr.bf16.mxu0 0
    %1712 = vmatpush2.bf16.msra.mxu0 0
    %1713 = vmatprep.subr.bf16.mxu0 0
    %1714 = vmatpush2.bf16.msra.mxu0 0
    %1715 = vmatprep.subr.bf16.mxu0 0
    %1716 = vmatpush2.bf16.msra.mxu0 0
    %1717 = vmatprep.subr.bf16.mxu0 0
    %1718 = vmatpush2.bf16.msra.mxu0 0
    %1719 = vmatprep.subr.bf16.mxu0 0
    %1720 = vmatpush2.bf16.msra.mxu0 0
    %1721 = vmatprep.subr.bf16.mxu0 0
    %1722 = vmatpush2.bf16.msra.mxu0 0
    %1723 = vmatprep.subr.bf16.mxu0 0
    %1724 = vmatpush2.bf16.msra.mxu0 %v1018
    %1725 = vmatprep.subr.bf16.mxu0 0
    %1726 = vmatpush2.bf16.msra.mxu0 %v1017
    %1727 = vmatprep.mubr.bf16.mxu0 %v1641
    %1728 = vmatmul.mubr.bf16.gmra.mxu0 %v1638
    %v1729 = vpop.f32.mrf.mxu0
    %v1730 = vadd.f32 %v1681, %v1729
    %v1731 = vpop.f32.mrf.mxu0
    %v1732 = vpop.f32.mrf.mxu0
    %v1733 = vadd.f32 %v1684, %v1732
    %v1734 = vpop.f32.mrf.mxu0
    %1735 = vmatprep.mubr.bf16.mxu0 %v1644
    %1736 = vmatmul.mubr.bf16.gmra.mxu0 %v1639
    %v1737 = vpop.f32.mrf.mxu0
    %v1738 = vadd.f32 %v1689, %v1737
    %v1739 = vpop.f32.mrf.mxu0
    %v1740 = vpop.f32.mrf.mxu0
    %v1741 = vadd.f32 %v1692, %v1740
    %v1742 = vpop.f32.mrf.mxu0
    %1743 = vdwg.mxu0
    %v1744 = vadd.f32 %v1159, %v1730
    %v1745 = vadd.f32 %v1160, %v1733
    %v1746 = vadd.f32 %v1161, %v1738
    %v1747 = vadd.f32 %v1162, %v1741
    %v1748 = vadd.f32 %v1744, %v1157
    %v1749 = vadd.f32 %v1745, %v1157
    %v1750 = vadd.f32 %v1746, %v1157
    %v1751 = vadd.f32 %v1747, %v1157
    %1752 = vst.msk [vmem:[#allocation2] sm:$0xff] %vm256, %v1748
    %1753 = vst.msk [vmem:[#allocation2 + $0x8] sm:$0xff] %vm256, %v1749
    %1754 = vst.msk [vmem:[#allocation2 + $0x10] sm:$0xff] %vm256, %v1750
    %1755 = vst.msk [vmem:[#allocation2 + $0x18] sm:$0xff] %vm256, %v1751
    // Predicated region
    $region38: #{tpu_custom_call.1} parent=1 // pred_check
      _
    $region39: #{tpu_custom_call.1} parent=1 // pred_check_branch
      %1757 = sbr.rel (0) target = $region41
    $region40: #{tpu_custom_call.1} parent=1 // pred_region
      %s1759 = ssub.s32 512, 512
      %1760 = vsyncadd [#allocation3], %s1759
      %s1761 = sshll.u32 [#allocation2], 4
      %s1762 = int_to_ptr.vmem [resolvable:$true] %s1761
      %1767 = dma.vmem_to_hbm [thread:$0]  %s1762, 512, %s9, [#allocation3], 128, 128, 8
    $region41: #{tpu_custom_call.1} parent=1 // pred_fallthru
      _
    // Predicated region
    $region42: #{tpu_custom_call.1} parent=1 // pred_check
      _
    $region43: #{tpu_custom_call.1} parent=1 // pred_check_branch
      %1769 = sbr.rel (0) target = $region45
    $region44: #{tpu_custom_call.1} parent=1 // pred_region
      %1770 = dma.done [#allocation3], 512
    $region45: #{tpu_custom_call.1} parent=1 // pred_fallthru
      _
    %1771 = vsyncpa [#allocation3], 1

</llo_original>
